<compile_context>
chip_gen: v6e
topology: v6e:2x2x1
jax: 0.10.0
libtpu: 0.0.40
codegen_flags: <defaults>
</compile_context>

<pallas_src>
import numpy as np
import jax
import jax.numpy as jnp
from jax import lax
from jax.experimental import pallas as pl
from jax.experimental.pallas import tpu as pltpu

NFT = 2              # nft in the original module
SL = 0.001           # LeakyReLU negative slope
BN_EPS = 1e-5
MAX_BATCH_TILE = 512 # batch lives on sublanes -> only needs to be a multiple of 8
R2P = 224            # conv2 output features (4*49 = 196) padded to a sublane multiple


def _leaky(x):
    return jnp.where(x >= 0, x, SL * x)


def _conv_operator_T(w, cin, h, wdt, stride, pad, pad_out_to=None):
    """Lower a conv2d weight to its dense per-sample operator, transposed.

    Returns (Mt, Ho, Wo) with  conv2d(x, w).reshape(N, -1) == x.reshape(N, -1) @ Mt[:, :R]
    (row-major NCHW flattening on both sides).  Built once per forward by convolving the
    identity basis -- weight-only work, no runtime scatter/gather on the data path.
    """
    eye = jnp.eye(cin * h * wdt, dtype=w.dtype).reshape(cin * h * wdt, cin, h, wdt)
    out = lax.conv_general_dilated(
        eye, w, (stride, stride), ((pad, pad), (pad, pad)),
        dimension_numbers=("NCHW", "OIHW", "NCHW"),
        precision=lax.Precision.HIGHEST)
    ho, wo = out.shape[2], out.shape[3]
    mt = out.reshape(cin * h * wdt, -1)
    if pad_out_to is not None and pad_out_to > mt.shape[1]:
        mt = jnp.pad(mt, ((0, 0), (0, pad_out_to - mt.shape[1])))
    return mt, ho, wo


@jax.jit
def discriminator_forward(x, params):
    w1, w2, g2, b2, w3 = params
    N = x.shape[0]
    C2 = 2 * NFT

    TB = min(MAX_BATCH_TILE, ((N + 7) // 8) * 8)   # batch tile (sublane axis)
    n_tiles = -(-N // TB)
    NP = n_tiles * TB

    # ---- weight-only preprocessing (tiny, batch independent) ----
    m1t, h1, w1o = _conv_operator_T(w1, 1, 28, 28, 2, 1)                     # (784, 392)
    m2t, h2, w2o = _conv_operator_T(w2, NFT, h1, w1o, 2, 1, pad_out_to=R2P)  # (392, 224)
    R1 = m1t.shape[1]
    P2 = h2 * w2o                     # 49 pixels per channel
    R2 = C2 * P2                      # 196 real conv2 features (zero-padded to R2P)
    m1b = m1t.astype(jnp.bfloat16)    # bf16 MXU operands; accumulation stays f32
    m2b = m2t.astype(jnp.bfloat16)

    # channel <-> feature-column selectors (static one-hots; pad rows are all-zero)
    selT_np = np.zeros((R2P, C2), np.float32)
    selT_np[np.arange(R2), np.arange(R2) // P2] = 1.0
    selT = jnp.asarray(selT_np)       # (224, 4)  feature-row -> channel
    sel = jnp.asarray(selT_np.T)      # (4, 224)  channel -> feature-row

    w3col = jnp.pad(w3.reshape(R2, 1), ((0, R2P - R2), (0, 0)))   # (224, 1)
    gamma = g2.reshape(1, C2)
    beta = b2.reshape(1, C2)

    x2 = x.reshape(N, 28 * 28)        # free reshape; no transpose / pad in XLA
    inv_cnt = 1.0 / float(P2 * N)     # BN statistics use the real element count

    def kernel(x_ref, m1_ref, m2_ref, sel_ref, selT_ref, g_ref, b_ref, w3_ref,
               o_ref, z2_scr, ssum_scr, ssq_scr, sc_scr, sh_scr):
        p = pl.program_id(0)          # phase: 0 = features + stats, 1 = BN head
        t = pl.program_id(1)          # batch tile

        @pl.when((p == 0) & (t == 0))
        def _init():
            ssum_scr[...] = jnp.zeros_like(ssum_scr)
            ssq_scr[...] = jnp.zeros_like(ssq_scr)

        @pl.when(p == 0)
        def _features():
            # conv1 + LeakyReLU + conv2 on the MXU in bf16 (f32 accumulation).
            xa = x_ref[...].astype(jnp.bfloat16)
            a1 = jnp.dot(xa, m1_ref[...], preferred_element_type=jnp.float32)
            a1 = _leaky(a1)
            z2 = jnp.dot(a1.astype(jnp.bfloat16), m2_ref[...],
                         preferred_element_type=jnp.float32)
            start = pl.multiple_of(t * TB, TB)
            z2_scr[pl.ds(start, TB), :] = z2          # stays in VMEM (no HBM round trip)
            if NP != N:                               # static: mask batch-padding rows
                rows = lax.broadcasted_iota(jnp.int32, (TB, 1), 0)
                z2 = jnp.where(rows + t * TB < N, z2, 0.0)
            ssum_scr[...] += jnp.sum(z2, axis=0, keepdims=True)
            ssq_scr[...] += jnp.sum(z2 * z2, axis=0, keepdims=True)

        @pl.when(p == 1)
        def _head():
            @pl.when(t == 0)
            def _finalize_stats():
                csum = jnp.dot(ssum_scr[...], selT_ref[...],
                               preferred_element_type=jnp.float32)     # (1, C2)
                csq = jnp.dot(ssq_scr[...], selT_ref[...],
                              preferred_element_type=jnp.float32)
                mean = csum * inv_cnt
                var = csq * inv_cnt - mean * mean      # biased variance (training-mode BN)
                scale_c = g_ref[...] * lax.rsqrt(var + BN_EPS)
                shift_c = b_ref[...] - mean * scale_c
                sc_scr[...] = jnp.dot(scale_c, sel_ref[...],
                                      preferred_element_type=jnp.float32)   # (1, R2P)
                sh_scr[...] = jnp.dot(shift_c, sel_ref[...],
                                      preferred_element_type=jnp.float32)

            start = pl.multiple_of(t * TB, TB)
            z2 = z2_scr[pl.ds(start, TB), :]
            a2 = _leaky(z2 * sc_scr[...] + sh_scr[...])          # folded BN + LReLU (f32)
            y = jnp.dot(a2, w3_ref[...], preferred_element_type=jnp.float32)  # (TB, 1)
            o_ref[...] = jax.nn.sigmoid(y)

    out = pl.pallas_call(
        kernel,
        out_shape=jax.ShapeDtypeStruct((NP, 1), jnp.float32),
        grid=(2, n_tiles),
        in_specs=[
            # x is only needed in phase 0; in phase 1 every step maps to block 0 so at
            # most one extra tile fetch happens across the phase boundary.
            pl.BlockSpec((TB, 28 * 28), lambda p, t: (t * (1 - p), 0)),
            pl.BlockSpec((28 * 28, R1), lambda p, t: (0, 0)),
            pl.BlockSpec((R1, R2P), lambda p, t: (0, 0)),
            pl.BlockSpec((C2, R2P), lambda p, t: (0, 0)),
            pl.BlockSpec((R2P, C2), lambda p, t: (0, 0)),
            pl.BlockSpec((1, C2), lambda p, t: (0, 0)),
            pl.BlockSpec((1, C2), lambda p, t: (0, 0)),
            pl.BlockSpec((R2P, 1), lambda p, t: (0, 0)),
        ],
        # Phase 0 parks the out window on block 0 (never written there); phase 1 writes
        # each tile right before its block retires.
        out_specs=pl.BlockSpec((TB, 1), lambda p, t: (t * p, 0)),
        scratch_shapes=[
            pltpu.VMEM((NP, R2P), jnp.float32),   # full-batch pre-BN activations
            pltpu.VMEM((1, R2P), jnp.float32),    # per-feature-row sum
            pltpu.VMEM((1, R2P), jnp.float32),    # per-feature-row sum of squares
            pltpu.VMEM((1, R2P), jnp.float32),    # folded BN scale per feature row
            pltpu.VMEM((1, R2P), jnp.float32),    # folded BN shift per feature row
        ],
        compiler_params=pltpu.CompilerParams(
            dimension_semantics=("arbitrary", "arbitrary")),
    )(x2, m1b, m2b, sel, selT, gamma, beta, w3col)

    return out[:N, 0].reshape(N, 1, 1, 1)


# ----------------------- pure-JAX reference (check) ------------------------

def reference_forward(x, params):
    w1, w2, g2, b2, w3 = params
    dn = ('NCHW', 'OIHW', 'NCHW')
    h = lax.conv_general_dilated(x, w1, (2, 2), ((1, 1), (1, 1)),
                                 dimension_numbers=dn, precision=lax.Precision.HIGHEST)
    h = jnp.where(h >= 0, h, SL * h)
    h = lax.conv_general_dilated(h, w2, (2, 2), ((1, 1), (1, 1)),
                                 dimension_numbers=dn, precision=lax.Precision.HIGHEST)
    mean = jnp.mean(h, axis=(0, 2, 3), keepdims=True)
    var = jnp.mean(jnp.square(h - mean), axis=(0, 2, 3), keepdims=True)
    h = (h - mean) * lax.rsqrt(var + BN_EPS)
    h = h * g2.reshape(1, -1, 1, 1) + b2.reshape(1, -1, 1, 1)
    h = jnp.where(h >= 0, h, SL * h)
    h = lax.conv_general_dilated(h, w3, (1, 1), ((0, 0), (0, 0)),
                                 dimension_numbers=dn, precision=lax.Precision.HIGHEST)
    return jax.nn.sigmoid(h)


if __name__ == "__main__":
    key = jax.random.PRNGKey(0)
    kx, k1, k2, k3 = jax.random.split(key, 4)

    N = 2
    x = jax.random.normal(kx, (N, 1, 28, 28), jnp.float32)   # MNIST-shaped NCHW input

    # Deterministic synthetic parameters (shapes from the module's __init__).
    w1 = jax.random.normal(k1, (NFT, 1, 4, 4), jnp.float32) * 0.1
    w2 = jax.random.normal(k2, (NFT * 2, NFT, 4, 4), jnp.float32) * 0.1
    w3 = jax.random.normal(k3, (1, NFT * 2, 7, 7), jnp.float32) * 0.1
    g2 = jnp.ones((NFT * 2,), jnp.float32)    # BatchNorm2d weight (default init)
    b2 = jnp.zeros((NFT * 2,), jnp.float32)   # BatchNorm2d bias   (default init)
    params = (w1, w2, g2, b2, w3)

    out = jax.block_until_ready(discriminator_forward(x, params))
    assert out.shape == (N, 1, 1, 1), out.shape

    ref = reference_forward(x, params)
    max_diff = float(jnp.max(jnp.abs(out - ref)))
    # Tolerance covers the intentional bf16 rounding of the two MXU matmuls.
    assert max_diff < 3e-2, f"mismatch vs reference: {max_diff}"

    print("KERNEL_OK")
</pallas_src>

<mosaic_0001>
module attributes {stable_mosaic.version = 11 : i64} {
  func.func @kernel(%arg0: i32, %arg1: i32, %arg2: memref<8x784xf32, #tpu.memory_space<vmem>>, %arg3: memref<784x392xbf16, #tpu.memory_space<vmem>>, %arg4: memref<392x224xbf16, #tpu.memory_space<vmem>>, %arg5: memref<4x224xf32, #tpu.memory_space<vmem>>, %arg6: memref<224x4xf32, #tpu.memory_space<vmem>>, %arg7: memref<1x4xf32, #tpu.memory_space<vmem>>, %arg8: memref<1x4xf32, #tpu.memory_space<vmem>>, %arg9: memref<224x1xf32, #tpu.memory_space<vmem>>, %arg10: memref<8x1xf32, #tpu.memory_space<vmem>>, %arg11: memref<8x224xf32, #tpu.memory_space<vmem>>, %arg12: memref<1x224xf32, #tpu.memory_space<vmem>>, %arg13: memref<1x224xf32, #tpu.memory_space<vmem>>, %arg14: memref<1x224xf32, #tpu.memory_space<vmem>>, %arg15: memref<1x224xf32, #tpu.memory_space<vmem>>) attributes {dimension_semantics = [#tpu.dimension_semantics<arbitrary>, #tpu.dimension_semantics<arbitrary>], iteration_bounds = array<i64: 2, 1>, scalar_prefetch = 0 : i64, scratch_operands = 5 : i64, tpu.core_type = #tpu.core_type<tc>, window_params = [{transform_indices = @transform_0, window_bounds = array<i64: 8, 784>}, {pipeline_mode = #tpu.pipeline_mode<synchronous>, transform_indices = @transform_1, window_bounds = array<i64: 784, 392>}, {pipeline_mode = #tpu.pipeline_mode<synchronous>, transform_indices = @transform_2, window_bounds = array<i64: 392, 224>}, {pipeline_mode = #tpu.pipeline_mode<synchronous>, transform_indices = @transform_3, window_bounds = array<i64: 4, 224>}, {pipeline_mode = #tpu.pipeline_mode<synchronous>, transform_indices = @transform_4, window_bounds = array<i64: 224, 4>}, {pipeline_mode = #tpu.pipeline_mode<synchronous>, transform_indices = @transform_5, window_bounds = array<i64: 1, 4>}, {pipeline_mode = #tpu.pipeline_mode<synchronous>, transform_indices = @transform_6, window_bounds = array<i64: 1, 4>}, {pipeline_mode = #tpu.pipeline_mode<synchronous>, transform_indices = @transform_7, window_bounds = array<i64: 224, 1>}, {transform_indices = @transform_8, window_bounds = array<i64: 8, 1>}]} {
    %c0_i32 = arith.constant 0 : i32
    %0 = arith.cmpi eq, %arg0, %c0_i32 : i32
    %c0_i32_0 = arith.constant 0 : i32
    %1 = arith.cmpi eq, %arg1, %c0_i32_0 : i32
    %2 = arith.andi %0, %1 : i1
    %3 = arith.extui %2 : i1 to i32
    %c0_i32_1 = arith.constant 0 : i32
    %4 = arith.cmpi ne, %3, %c0_i32_1 : i32
    scf.if %4 {
      %cst = arith.constant 0.000000e+00 : f32
      %11 = vector.broadcast %cst : f32 to vector<1x224xf32>
      %c0 = arith.constant 0 : index
      %c0_5 = arith.constant 0 : index
      %12 = vector.load %arg12[%c0, %c0_5] : memref<1x224xf32, #tpu.memory_space<vmem>>, vector<1x224xf32>
      tpu.vector_store %arg12[%c0, %c0_5], %11 {strides = array<i32>} : memref<1x224xf32, #tpu.memory_space<vmem>>, vector<1x224xf32>,
      %cst_6 = arith.constant 0.000000e+00 : f32
      %13 = vector.broadcast %cst_6 : f32 to vector<1x224xf32>
      %c0_7 = arith.constant 0 : index
      %c0_8 = arith.constant 0 : index
      %14 = vector.load %arg13[%c0_7, %c0_8] : memref<1x224xf32, #tpu.memory_space<vmem>>, vector<1x224xf32>
      tpu.vector_store %arg13[%c0_7, %c0_8], %13 {strides = array<i32>} : memref<1x224xf32, #tpu.memory_space<vmem>>, vector<1x224xf32>,
    } else {
    }
    %c0_i32_2 = arith.constant 0 : i32
    %5 = arith.cmpi eq, %arg0, %c0_i32_2 : i32
    %6 = arith.extui %5 : i1 to i32
    %c0_i32_3 = arith.constant 0 : i32
    %7 = arith.cmpi ne, %6, %c0_i32_3 : i32
    scf.if %7 {
      %c0 = arith.constant 0 : index
      %c0_5 = arith.constant 0 : index
      %11 = vector.load %arg2[%c0, %c0_5] : memref<8x784xf32, #tpu.memory_space<vmem>>, vector<8x784xf32>
      %12 = arith.truncf %11 : vector<8x784xf32> to vector<8x784xbf16>
      %c0_6 = arith.constant 0 : index
      %c0_7 = arith.constant 0 : index
      %13 = vector.load %arg3[%c0_6, %c0_7] : memref<784x392xbf16, #tpu.memory_space<vmem>>, vector<784x392xbf16>
      %cst = arith.constant dense<0.000000e+00> : vector<8x392xf32>
      %14 = tpu.matmul %12, %13, %cst {dimension_numbers = #tpu.dot_dimension_numbers<[1], [0], [0], [1], [0, 0, 1, 1], [], []>} : vector<8x784xbf16>, vector<784x392xbf16>, vector<8x392xf32> -> vector<8x392xf32>
      %cst_8 = arith.constant 0.000000e+00 : f32
      %15 = vector.broadcast %cst_8 : f32 to vector<8x392xf32>
      %16 = arith.cmpf oge, %14, %15 : vector<8x392xf32>
      %cst_9 = arith.constant 1.000000e-03 : f32
      %17 = vector.broadcast %cst_9 : f32 to vector<8x392xf32>
      %18 = arith.mulf %17, %14 : vector<8x392xf32>
      %19 = arith.select %16, %14, %18 : vector<8x392xi1>, vector<8x392xf32>
      %20 = arith.truncf %19 : vector<8x392xf32> to vector<8x392xbf16>
      %c0_10 = arith.constant 0 : index
      %c0_11 = arith.constant 0 : index
      %21 = vector.load %arg4[%c0_10, %c0_11] : memref<392x224xbf16, #tpu.memory_space<vmem>>, vector<392x224xbf16>
      %cst_12 = arith.constant dense<0.000000e+00> : vector<8x224xf32>
      %22 = tpu.matmul %20, %21, %cst_12 {dimension_numbers = #tpu.dot_dimension_numbers<[1], [0], [0], [1], [0, 0, 1, 1], [], []>} : vector<8x392xbf16>, vector<392x224xbf16>, vector<8x224xf32> -> vector<8x224xf32>
      %c8_i32 = arith.constant 8 : i32
      %23 = arith.muli %arg1, %c8_i32 : i32
      %24 = tpu.assume_multiple %23, 8 : i32
      %25 = arith.index_cast %24 : i32 to index
      %c0_13 = arith.constant 0 : index
      %26 = vector.load %arg11[%25, %c0_13] : memref<8x224xf32, #tpu.memory_space<vmem>>, vector<8x224xf32>
      tpu.vector_store %arg11[%25, %c0_13], %22 {strides = array<i32>} : memref<8x224xf32, #tpu.memory_space<vmem>>, vector<8x224xf32>,
      %27 = tpu.iota {dimensions = array<i32: 0>} : vector<8x1xi32>
      %c8_i32_14 = arith.constant 8 : i32
      %28 = arith.muli %arg1, %c8_i32_14 : i32
      %29 = vector.broadcast %28 : i32 to vector<8x1xi32>
      %30 = arith.addi %27, %29 : vector<8x1xi32>
      %c2_i32 = arith.constant 2 : i32
      %31 = vector.broadcast %c2_i32 : i32 to vector<8x1xi32>
      %32 = arith.cmpi slt, %30, %31 : vector<8x1xi32>
      %cst_15 = arith.constant 0.000000e+00 : f32
      %33 = vector.shape_cast %32 : vector<8x1xi1> to vector<8x1xi1>
      %34 = vector.broadcast %33 : vector<8x1xi1> to vector<8x224xi1>
      %35 = vector.broadcast %cst_15 : f32 to vector<8x224xf32>
      %36 = arith.select %34, %22, %35 : vector<8x224xi1>, vector<8x224xf32>
      %c0_16 = arith.constant 0 : index
      %c0_17 = arith.constant 0 : index
      %37 = vector.load %arg12[%c0_16, %c0_17] : memref<1x224xf32, #tpu.memory_space<vmem>>, vector<1x224xf32>
      %cst_18 = arith.constant dense<0.000000e+00> : vector<224xf32>
      %38 = vector.multi_reduction <add>, %36, %cst_18 [0] : vector<8x224xf32> to vector<224xf32>
      %39 = vector.shape_cast %38 : vector<224xf32> to vector<1x224xf32>
      %40 = arith.addf %37, %39 : vector<1x224xf32>
      %c0_19 = arith.constant 0 : index
      %c0_20 = arith.constant 0 : index
      %41 = vector.load %arg12[%c0_19, %c0_20] : memref<1x224xf32, #tpu.memory_space<vmem>>, vector<1x224xf32>
      tpu.vector_store %arg12[%c0_19, %c0_20], %40 {strides = array<i32>} : memref<1x224xf32, #tpu.memory_space<vmem>>, vector<1x224xf32>,
      %c0_21 = arith.constant 0 : index
      %c0_22 = arith.constant 0 : index
      %42 = vector.load %arg13[%c0_21, %c0_22] : memref<1x224xf32, #tpu.memory_space<vmem>>, vector<1x224xf32>
      %43 = arith.mulf %36, %36 : vector<8x224xf32>
      %cst_23 = arith.constant dense<0.000000e+00> : vector<224xf32>
      %44 = vector.multi_reduction <add>, %43, %cst_23 [0] : vector<8x224xf32> to vector<224xf32>
      %45 = vector.shape_cast %44 : vector<224xf32> to vector<1x224xf32>
      %46 = arith.addf %42, %45 : vector<1x224xf32>
      %c0_24 = arith.constant 0 : index
      %c0_25 = arith.constant 0 : index
      %47 = vector.load %arg13[%c0_24, %c0_25] : memref<1x224xf32, #tpu.memory_space<vmem>>, vector<1x224xf32>
      tpu.vector_store %arg13[%c0_24, %c0_25], %46 {strides = array<i32>} : memref<1x224xf32, #tpu.memory_space<vmem>>, vector<1x224xf32>,
    } else {
    }
    %c1_i32 = arith.constant 1 : i32
    %8 = arith.cmpi eq, %arg0, %c1_i32 : i32
    %9 = arith.extui %8 : i1 to i32
    %c0_i32_4 = arith.constant 0 : i32
    %10 = arith.cmpi ne, %9, %c0_i32_4 : i32
    scf.if %10 {
      %c0_i32_5 = arith.constant 0 : i32
      %11 = arith.cmpi eq, %arg1, %c0_i32_5 : i32
      %12 = arith.extui %11 : i1 to i32
      %c0_i32_6 = arith.constant 0 : i32
      %13 = arith.cmpi ne, %12, %c0_i32_6 : i32
      scf.if %13 {
        %c0_18 = arith.constant 0 : index
        %c0_19 = arith.constant 0 : index
        %37 = vector.load %arg12[%c0_18, %c0_19] : memref<1x224xf32, #tpu.memory_space<vmem>>, vector<1x224xf32>
        %c0_20 = arith.constant 0 : index
        %c0_21 = arith.constant 0 : index
        %38 = vector.load %arg6[%c0_20, %c0_21] : memref<224x4xf32, #tpu.memory_space<vmem>>, vector<224x4xf32>
        %cst_22 = arith.constant dense<0.000000e+00> : vector<1x4xf32>
        %39 = tpu.matmul %37, %38, %cst_22 {dimension_numbers = #tpu.dot_dimension_numbers<[1], [0], [0], [1], [0, 0, 1, 1], [], []>} : vector<1x224xf32>, vector<224x4xf32>, vector<1x4xf32> -> vector<1x4xf32>
        %c0_23 = arith.constant 0 : index
        %c0_24 = arith.constant 0 : index
        %40 = vector.load %arg13[%c0_23, %c0_24] : memref<1x224xf32, #tpu.memory_space<vmem>>, vector<1x224xf32>
        %c0_25 = arith.constant 0 : index
        %c0_26 = arith.constant 0 : index
        %41 = vector.load %arg6[%c0_25, %c0_26] : memref<224x4xf32, #tpu.memory_space<vmem>>, vector<224x4xf32>
        %cst_27 = arith.constant dense<0.000000e+00> : vector<1x4xf32>
        %42 = tpu.matmul %40, %41, %cst_27 {dimension_numbers = #tpu.dot_dimension_numbers<[1], [0], [0], [1], [0, 0, 1, 1], [], []>} : vector<1x224xf32>, vector<224x4xf32>, vector<1x4xf32> -> vector<1x4xf32>
        %cst_28 = arith.constant 0.0102040814 : f32
        %43 = vector.broadcast %cst_28 : f32 to vector<1x4xf32>
        %44 = arith.mulf %39, %43 : vector<1x4xf32>
        %cst_29 = arith.constant 0.0102040814 : f32
        %45 = vector.broadcast %cst_29 : f32 to vector<1x4xf32>
        %46 = arith.mulf %42, %45 : vector<1x4xf32>
        %47 = arith.mulf %44, %44 : vector<1x4xf32>
        %48 = arith.subf %46, %47 : vector<1x4xf32>
        %c0_30 = arith.constant 0 : index
        %c0_31 = arith.constant 0 : index
        %49 = vector.load %arg7[%c0_30, %c0_31] : memref<1x4xf32, #tpu.memory_space<vmem>>, vector<1x4xf32>
        %cst_32 = arith.constant 9.99999974E-6 : f32
        %50 = vector.broadcast %cst_32 : f32 to vector<1x4xf32>
        %51 = arith.addf %48, %50 : vector<1x4xf32>
        %52 = math.rsqrt %51 : vector<1x4xf32>
        %53 = arith.mulf %49, %52 : vector<1x4xf32>
        %c0_33 = arith.constant 0 : index
        %c0_34 = arith.constant 0 : index
        %54 = vector.load %arg8[%c0_33, %c0_34] : memref<1x4xf32, #tpu.memory_space<vmem>>, vector<1x4xf32>
        %55 = arith.mulf %44, %53 : vector<1x4xf32>
        %56 = arith.subf %54, %55 : vector<1x4xf32>
        %c0_35 = arith.constant 0 : index
        %c0_36 = arith.constant 0 : index
        %57 = vector.load %arg5[%c0_35, %c0_36] : memref<4x224xf32, #tpu.memory_space<vmem>>, vector<4x224xf32>
        %cst_37 = arith.constant dense<0.000000e+00> : vector<1x224xf32>
        %58 = tpu.matmul %53, %57, %cst_37 {dimension_numbers = #tpu.dot_dimension_numbers<[1], [0], [0], [1], [0, 0, 1, 1], [], []>} : vector<1x4xf32>, vector<4x224xf32>, vector<1x224xf32> -> vector<1x224xf32>
        %c0_38 = arith.constant 0 : index
        %c0_39 = arith.constant 0 : index
        %59 = vector.load %arg14[%c0_38, %c0_39] : memref<1x224xf32, #tpu.memory_space<vmem>>, vector<1x224xf32>
        tpu.vector_store %arg14[%c0_38, %c0_39], %58 {strides = array<i32>} : memref<1x224xf32, #tpu.memory_space<vmem>>, vector<1x224xf32>,
        %c0_40 = arith.constant 0 : index
        %c0_41 = arith.constant 0 : index
        %60 = vector.load %arg5[%c0_40, %c0_41] : memref<4x224xf32, #tpu.memory_space<vmem>>, vector<4x224xf32>
        %cst_42 = arith.constant dense<0.000000e+00> : vector<1x224xf32>
        %61 = tpu.matmul %56, %60, %cst_42 {dimension_numbers = #tpu.dot_dimension_numbers<[1], [0], [0], [1], [0, 0, 1, 1], [], []>} : vector<1x4xf32>, vector<4x224xf32>, vector<1x224xf32> -> vector<1x224xf32>
        %c0_43 = arith.constant 0 : index
        %c0_44 = arith.constant 0 : index
        %62 = vector.load %arg15[%c0_43, %c0_44] : memref<1x224xf32, #tpu.memory_space<vmem>>, vector<1x224xf32>
        tpu.vector_store %arg15[%c0_43, %c0_44], %61 {strides = array<i32>} : memref<1x224xf32, #tpu.memory_space<vmem>>, vector<1x224xf32>,
      } else {
      }
      %c8_i32 = arith.constant 8 : i32
      %14 = arith.muli %arg1, %c8_i32 : i32
      %15 = tpu.assume_multiple %14, 8 : i32
      %16 = arith.index_cast %15 : i32 to index
      %c0 = arith.constant 0 : index
      %17 = vector.load %arg11[%16, %c0] : memref<8x224xf32, #tpu.memory_space<vmem>>, vector<8x224xf32>
      %c0_7 = arith.constant 0 : index
      %c0_8 = arith.constant 0 : index
      %18 = vector.load %arg14[%c0_7, %c0_8] : memref<1x224xf32, #tpu.memory_space<vmem>>, vector<1x224xf32>
      %19 = vector.broadcast %18 : vector<1x224xf32> to vector<8x224xf32>
      %20 = arith.mulf %17, %19 : vector<8x224xf32>
      %c0_9 = arith.constant 0 : index
      %c0_10 = arith.constant 0 : index
      %21 = vector.load %arg15[%c0_9, %c0_10] : memref<1x224xf32, #tpu.memory_space<vmem>>, vector<1x224xf32>
      %22 = vector.broadcast %21 : vector<1x224xf32> to vector<8x224xf32>
      %23 = arith.addf %20, %22 : vector<8x224xf32>
      %cst = arith.constant 0.000000e+00 : f32
      %24 = vector.broadcast %cst : f32 to vector<8x224xf32>
      %25 = arith.cmpf oge, %23, %24 : vector<8x224xf32>
      %cst_11 = arith.constant 1.000000e-03 : f32
      %26 = vector.broadcast %cst_11 : f32 to vector<8x224xf32>
      %27 = arith.mulf %26, %23 : vector<8x224xf32>
      %28 = arith.select %25, %23, %27 : vector<8x224xi1>, vector<8x224xf32>
      %c0_12 = arith.constant 0 : index
      %c0_13 = arith.constant 0 : index
      %29 = vector.load %arg9[%c0_12, %c0_13] : memref<224x1xf32, #tpu.memory_space<vmem>>, vector<224x1xf32>
      %cst_14 = arith.constant dense<0.000000e+00> : vector<8x1xf32>
      %30 = tpu.matmul %28, %29, %cst_14 {dimension_numbers = #tpu.dot_dimension_numbers<[1], [0], [0], [1], [0, 0, 1, 1], [], []>} : vector<8x224xf32>, vector<224x1xf32>, vector<8x1xf32> -> vector<8x1xf32>
      %31 = arith.negf %30 : vector<8x1xf32>
      %32 = math.exp %31 : vector<8x1xf32>
      %cst_15 = arith.constant 1.000000e+00 : f32
      %33 = vector.broadcast %cst_15 : f32 to vector<8x1xf32>
      %34 = arith.addf %33, %32 : vector<8x1xf32>
      %35 = arith.divf %33, %34 : vector<8x1xf32>
      %c0_16 = arith.constant 0 : index
      %c0_17 = arith.constant 0 : index
      %36 = vector.load %arg10[%c0_16, %c0_17] : memref<8x1xf32, #tpu.memory_space<vmem>>, vector<8x1xf32>
      tpu.vector_store %arg10[%c0_16, %c0_17], %35 {strides = array<i32>} : memref<8x1xf32, #tpu.memory_space<vmem>>, vector<8x1xf32>,
    } else {
    }
    return
  }
  func.func @transform_0(%arg0: i32, %arg1: i32) -> (i32, i32) {
    %c1_i32 = arith.constant 1 : i32
    %0 = arith.subi %c1_i32, %arg0 : i32
    %1 = arith.muli %arg1, %0 : i32
    %c0_i32 = arith.constant 0 : i32
    %c0_i32_0 = arith.constant 0 : i32
    return %1, %c0_i32 : i32, i32
  }
  func.func @transform_1(%arg0: i32, %arg1: i32) -> (i32, i32) {
    %c0_i32 = arith.constant 0 : i32
    %c0_i32_0 = arith.constant 0 : i32
    %c0_i32_1 = arith.constant 0 : i32
    return %c0_i32, %c0_i32_0 : i32, i32
  }
  func.func @transform_2(%arg0: i32, %arg1: i32) -> (i32, i32) {
    %c0_i32 = arith.constant 0 : i32
    %c0_i32_0 = arith.constant 0 : i32
    %c0_i32_1 = arith.constant 0 : i32
    return %c0_i32, %c0_i32_0 : i32, i32
  }
  func.func @transform_3(%arg0: i32, %arg1: i32) -> (i32, i32) {
    %c0_i32 = arith.constant 0 : i32
    %c0_i32_0 = arith.constant 0 : i32
    %c0_i32_1 = arith.constant 0 : i32
    return %c0_i32, %c0_i32_0 : i32, i32
  }
  func.func @transform_4(%arg0: i32, %arg1: i32) -> (i32, i32) {
    %c0_i32 = arith.constant 0 : i32
    %c0_i32_0 = arith.constant 0 : i32
    %c0_i32_1 = arith.constant 0 : i32
    return %c0_i32, %c0_i32_0 : i32, i32
  }
  func.func @transform_5(%arg0: i32, %arg1: i32) -> (i32, i32) {
    %c0_i32 = arith.constant 0 : i32
    %c0_i32_0 = arith.constant 0 : i32
    %c0_i32_1 = arith.constant 0 : i32
    return %c0_i32, %c0_i32_0 : i32, i32
  }
  func.func @transform_6(%arg0: i32, %arg1: i32) -> (i32, i32) {
    %c0_i32 = arith.constant 0 : i32
    %c0_i32_0 = arith.constant 0 : i32
    %c0_i32_1 = arith.constant 0 : i32
    return %c0_i32, %c0_i32_0 : i32, i32
  }
  func.func @transform_7(%arg0: i32, %arg1: i32) -> (i32, i32) {
    %c0_i32 = arith.constant 0 : i32
    %c0_i32_0 = arith.constant 0 : i32
    %c0_i32_1 = arith.constant 0 : i32
    return %c0_i32, %c0_i32_0 : i32, i32
  }
  func.func @transform_8(%arg0: i32, %arg1: i32) -> (i32, i32) {
    %0 = arith.muli %arg1, %arg0 : i32
    %c0_i32 = arith.constant 0 : i32
    %c0_i32_0 = arith.constant 0 : i32
    return %0, %c0_i32 : i32, i32
  }
}

</mosaic_0001>

<llo_original>
// kernel: discriminator_forward.1
$region0: #{discriminator_forward.1}
  #allocation0 [shape = 'u32[]', space=smem, size = 0x4, offset = 0x4, fixed_abs, tag = 'smem constant byte address 0x4 - core index']
  #allocation1 [shape = 'u32[144,128]{1,0:T(1,128)}', space=vmem, size = 0x12000, scoped, tag = 'internal scratch']
  #allocation2 [shape = 'f32[8,224]{1,0:T(8,128)}', space=vmem, size = 0x2000, scoped, tag = 'scratch operand']
  #allocation3 [shape = 'f32[1,224]{1,0:T(1,128)}', space=vmem, size = 0x400, scoped, tag = 'scratch operand']
  #allocation4 [shape = 'f32[1,224]{1,0:T(1,128)}', space=vmem, size = 0x400, scoped, tag = 'scratch operand']
  #allocation5 [shape = 'f32[1,224]{1,0:T(1,128)}', space=vmem, size = 0x400, scoped, tag = 'scratch operand']
  #allocation6 [shape = 'f32[1,224]{1,0:T(1,128)}', space=vmem, size = 0x400, scoped, tag = 'scratch operand']
  %s0 = inlined_call_operand.vmem [shape: f32[2,784], index: 0, kind: input, shape index: {}]
  %s1 = inlined_call_operand.vmem [shape: bf16[784,392], index: 1, kind: input, shape index: {}]
  %s2 = inlined_call_operand.vmem [shape: bf16[392,224], index: 2, kind: input, shape index: {}]
  %s3 = inlined_call_operand.vmem [shape: f32[4,224], index: 3, kind: input, shape index: {}]
  %s4 = inlined_call_operand.vmem [shape: f32[224,4], index: 4, kind: input, shape index: {}]
  %s5 = inlined_call_operand.vmem [shape: f32[1,4], index: 5, kind: input, shape index: {}]
  %s6 = inlined_call_operand.vmem [shape: f32[1,4], index: 6, kind: input, shape index: {}]
  %s7 = inlined_call_operand.vmem [shape: f32[224,1], index: 7, kind: input, shape index: {}]
  %s8 = inlined_call_operand.vmem [shape: f32[8,1], index: 8, kind: output, shape index: {}]
  %s9 = sld [smem:[#allocation0]]
  $region81: #{discriminator_forward.1} parent=0
    _
  %s11 = ssub.s32 1, %s9
  %s12 = scalar_select 0, %s11, %s9
  loop: start=0, step=1, limit=4
  $region2: #{discriminator_forward.1} parent=0 // loop_pre_header
    _
  $region3: #{discriminator_forward.1} parent=0 // loop_header
    %s14 = sphi 0, %s18
    %p15 = scmp.ge.s32.totalorder %s14, 4
    %s21 = sphi 0, %s33
    %s22 = sphi 0, %s29
    %s23 = sphi 0, %s21
    %s24 = sphi 0, %s22
    %s25 = sphi 0, %s23
    %s26 = sphi 0, %s24
    %s40 = sphi 0, %s42
    %s43 = sphi 0, %s40
    %s44 = sphi 0, %s43
    %s60 = sphi 0, %s44
    %s64 = sphi 0, %s64
    %s66 = sphi 0, %s64
    %s67 = sphi 0, %s66
    %s81 = sphi 0, %s67
    %s85 = sphi 0, %s85
    %s87 = sphi 0, %s85
    %s88 = sphi 0, %s87
    %s102 = sphi 0, %s88
    %s106 = sphi 0, %s106
    %s108 = sphi 0, %s106
    %s109 = sphi 0, %s108
    %s123 = sphi 0, %s109
    %s127 = sphi 0, %s127
    %s129 = sphi 0, %s127
    %s130 = sphi 0, %s129
    %s144 = sphi 0, %s130
    %s148 = sphi 0, %s148
    %s150 = sphi 0, %s148
    %s151 = sphi 0, %s150
    %s165 = sphi 0, %s151
    %s169 = sphi 0, %s169
    %s171 = sphi 0, %s169
    %s172 = sphi 0, %s171
    %s186 = sphi 0, %s172
    %s190 = sphi 0, %s190
    %s192 = sphi 0, %s190
    %s193 = sphi 0, %s192
    %s207 = sphi 0, %s193
    %s215 = sphi 0, %s217
    %s218 = sphi 0, %s215
    %s219 = sphi 0, %s218
    %s235 = sphi 0, %s219
  $region4: #{discriminator_forward.1} parent=0 // loop_header_branch
    %17 = sbr.rel (%p15) target = $region8
  $region5: #{discriminator_forward.1} parent=0 // loop_body
    %s19 = ssub.s32 %s14, 1
    %s20 = ssub.s32 %s14, 2
    %s27 = sadd.s32 1, %s22
    %p28 = scmp.ge.s32.totalorder %s27, 1
    %s29 = scalar_select %p28, 0, %s27
    %s30 = sadd.s32 1, %s21
    %s31 = scalar_select %p28, %s30, %s21
    %p32 = scmp.ge.s32.totalorder %s31, 2
    %s33 = scalar_select %p32, 0, %s31
    %s34 = ssub.s32 1, %s21
    %s35 = smul.u32 %s22, %s34
    %s36 = ssub.s32 1, %s33
    %s37 = smul.u32 %s29, %s36
    %s38 = ssub.s32 %s35, %s37
    %p39 = scmp.eq.s32.totalorder %s38, 0
    %s41 = sadd.s32 %s40, 1
    %s42 = scalar_select %p39, %s40, %s41
    %p45 = pneg %p39
    %p46 = scmp.eq.s32.totalorder %s14, 1
    %p47 = por %p45, %p46
    %p48 = scmp.ne.s32.totalorder %s40, %s43
    %p49 = scmp.eq.s32.totalorder %s14, 0
    %p50 = por %p48, %p49
    %p51 = scmp.ne.s32.totalorder %s40, %s43
    %p52 = scmp.eq.s32.totalorder %s19, 1
    %p53 = por %p51, %p52
    %p54 = scmp.ne.s32.totalorder %s43, %s44
    %p55 = scmp.eq.s32.totalorder %s19, 0
    %p56 = por %p54, %p55
    %p57 = scmp.ne.s32.totalorder %s43, %s44
    %p58 = scmp.eq.s32.totalorder %s20, 1
    %p59 = por %p57, %p58
    %p61 = scmp.ne.s32.totalorder %s44, %s60
    %p62 = scmp.eq.s32.totalorder %s20, 0
    %p63 = por %p61, %p62
    %s65 = sadd.s32 %s64, 1
    %p68 = scmp.eq.s32.totalorder %s14, 1
    %p69 = scmp.ne.s32.totalorder %s64, %s66
    %p70 = scmp.eq.s32.totalorder %s14, 0
    %p71 = por %p69, %p70
    %p72 = scmp.ne.s32.totalorder %s64, %s66
    %p73 = scmp.eq.s32.totalorder %s19, 1
    %p74 = por %p72, %p73
    %p75 = scmp.ne.s32.totalorder %s66, %s67
    %p76 = scmp.eq.s32.totalorder %s19, 0
    %p77 = por %p75, %p76
    %p78 = scmp.ne.s32.totalorder %s66, %s67
    %p79 = scmp.eq.s32.totalorder %s20, 1
    %p80 = por %p78, %p79
    %p82 = scmp.ne.s32.totalorder %s67, %s81
    %p83 = scmp.eq.s32.totalorder %s20, 0
    %p84 = por %p82, %p83
    %s86 = sadd.s32 %s85, 1
    %p89 = scmp.eq.s32.totalorder %s14, 1
    %p90 = scmp.ne.s32.totalorder %s85, %s87
    %p91 = scmp.eq.s32.totalorder %s14, 0
    %p92 = por %p90, %p91
    %p93 = scmp.ne.s32.totalorder %s85, %s87
    %p94 = scmp.eq.s32.totalorder %s19, 1
    %p95 = por %p93, %p94
    %p96 = scmp.ne.s32.totalorder %s87, %s88
    %p97 = scmp.eq.s32.totalorder %s19, 0
    %p98 = por %p96, %p97
    %p99 = scmp.ne.s32.totalorder %s87, %s88
    %p100 = scmp.eq.s32.totalorder %s20, 1
    %p101 = por %p99, %p100
    %p103 = scmp.ne.s32.totalorder %s88, %s102
    %p104 = scmp.eq.s32.totalorder %s20, 0
    %p105 = por %p103, %p104
    %s107 = sadd.s32 %s106, 1
    %p110 = scmp.eq.s32.totalorder %s14, 1
    %p111 = scmp.ne.s32.totalorder %s106, %s108
    %p112 = scmp.eq.s32.totalorder %s14, 0
    %p113 = por %p111, %p112
    %p114 = scmp.ne.s32.totalorder %s106, %s108
    %p115 = scmp.eq.s32.totalorder %s19, 1
    %p116 = por %p114, %p115
    %p117 = scmp.ne.s32.totalorder %s108, %s109
    %p118 = scmp.eq.s32.totalorder %s19, 0
    %p119 = por %p117, %p118
    %p120 = scmp.ne.s32.totalorder %s108, %s109
    %p121 = scmp.eq.s32.totalorder %s20, 1
    %p122 = por %p120, %p121
    %p124 = scmp.ne.s32.totalorder %s109, %s123
    %p125 = scmp.eq.s32.totalorder %s20, 0
    %p126 = por %p124, %p125
    %s128 = sadd.s32 %s127, 1
    %p131 = scmp.eq.s32.totalorder %s14, 1
    %p132 = scmp.ne.s32.totalorder %s127, %s129
    %p133 = scmp.eq.s32.totalorder %s14, 0
    %p134 = por %p132, %p133
    %p135 = scmp.ne.s32.totalorder %s127, %s129
    %p136 = scmp.eq.s32.totalorder %s19, 1
    %p137 = por %p135, %p136
    %p138 = scmp.ne.s32.totalorder %s129, %s130
    %p139 = scmp.eq.s32.totalorder %s19, 0
    %p140 = por %p138, %p139
    %p141 = scmp.ne.s32.totalorder %s129, %s130
    %p142 = scmp.eq.s32.totalorder %s20, 1
    %p143 = por %p141, %p142
    %p145 = scmp.ne.s32.totalorder %s130, %s144
    %p146 = scmp.eq.s32.totalorder %s20, 0
    %p147 = por %p145, %p146
    %s149 = sadd.s32 %s148, 1
    %p152 = scmp.eq.s32.totalorder %s14, 1
    %p153 = scmp.ne.s32.totalorder %s148, %s150
    %p154 = scmp.eq.s32.totalorder %s14, 0
    %p155 = por %p153, %p154
    %p156 = scmp.ne.s32.totalorder %s148, %s150
    %p157 = scmp.eq.s32.totalorder %s19, 1
    %p158 = por %p156, %p157
    %p159 = scmp.ne.s32.totalorder %s150, %s151
    %p160 = scmp.eq.s32.totalorder %s19, 0
    %p161 = por %p159, %p160
    %p162 = scmp.ne.s32.totalorder %s150, %s151
    %p163 = scmp.eq.s32.totalorder %s20, 1
    %p164 = por %p162, %p163
    %p166 = scmp.ne.s32.totalorder %s151, %s165
    %p167 = scmp.eq.s32.totalorder %s20, 0
    %p168 = por %p166, %p167
    %s170 = sadd.s32 %s169, 1
    %p173 = scmp.eq.s32.totalorder %s14, 1
    %p174 = scmp.ne.s32.totalorder %s169, %s171
    %p175 = scmp.eq.s32.totalorder %s14, 0
    %p176 = por %p174, %p175
    %p177 = scmp.ne.s32.totalorder %s169, %s171
    %p178 = scmp.eq.s32.totalorder %s19, 1
    %p179 = por %p177, %p178
    %p180 = scmp.ne.s32.totalorder %s171, %s172
    %p181 = scmp.eq.s32.totalorder %s19, 0
    %p182 = por %p180, %p181
    %p183 = scmp.ne.s32.totalorder %s171, %s172
    %p184 = scmp.eq.s32.totalorder %s20, 1
    %p185 = por %p183, %p184
    %p187 = scmp.ne.s32.totalorder %s172, %s186
    %p188 = scmp.eq.s32.totalorder %s20, 0
    %p189 = por %p187, %p188
    %s191 = sadd.s32 %s190, 1
    %p194 = scmp.eq.s32.totalorder %s14, 1
    %p195 = scmp.ne.s32.totalorder %s190, %s192
    %p196 = scmp.eq.s32.totalorder %s14, 0
    %p197 = por %p195, %p196
    %p198 = scmp.ne.s32.totalorder %s190, %s192
    %p199 = scmp.eq.s32.totalorder %s19, 1
    %p200 = por %p198, %p199
    %p201 = scmp.ne.s32.totalorder %s192, %s193
    %p202 = scmp.eq.s32.totalorder %s19, 0
    %p203 = por %p201, %p202
    %p204 = scmp.ne.s32.totalorder %s192, %s193
    %p205 = scmp.eq.s32.totalorder %s20, 1
    %p206 = por %p204, %p205
    %p208 = scmp.ne.s32.totalorder %s193, %s207
    %p209 = scmp.eq.s32.totalorder %s20, 0
    %p210 = por %p208, %p209
    %s211 = smul.u32 %s22, %s21
    %s212 = smul.u32 %s29, %s33
    %s213 = ssub.s32 %s211, %s212
    %p214 = scmp.eq.s32.totalorder %s213, 0
    %s216 = sadd.s32 %s215, 1
    %s217 = scalar_select %p214, %s215, %s216
    %p220 = pneg %p214
    %p221 = scmp.eq.s32.totalorder %s14, 1
    %p222 = por %p220, %p221
    %p223 = scmp.ne.s32.totalorder %s215, %s218
    %p224 = scmp.eq.s32.totalorder %s14, 0
    %p225 = por %p223, %p224
    %p226 = scmp.ne.s32.totalorder %s215, %s218
    %p227 = scmp.eq.s32.totalorder %s19, 1
    %p228 = por %p226, %p227
    %p229 = scmp.ne.s32.totalorder %s218, %s219
    %p230 = scmp.eq.s32.totalorder %s19, 0
    %p231 = por %p229, %p230
    %p232 = scmp.ne.s32.totalorder %s218, %s219
    %p233 = scmp.eq.s32.totalorder %s20, 1
    %p234 = por %p232, %p233
    %p236 = scmp.ne.s32.totalorder %s219, %s235
    %p237 = scmp.eq.s32.totalorder %s20, 0
    %p238 = por %p236, %p237
    %p239 = scmp.le.s32.totalorder 1, %s14
    %p240 = scmp.lt.s32.totalorder %s14, 3
    %p241 = pnand %p239, %p240
    %p242 = pneg %p241
    // Predicated region
    $region9: #{discriminator_forward.1} parent=5 // pred_check
      _
    $region10: #{discriminator_forward.1} parent=5 // pred_check_branch
      %244 = sbr.rel (%p241) target = $region12
    $region11: #{discriminator_forward.1} parent=5 // pred_region
      %s245 = ssub.s32 %s14, 1
      // Predicated region
      $region13: #{discriminator_forward.1} parent=11 // pred_check
        %p246 = pneg %p77
      $region14: #{discriminator_forward.1} parent=11 // pred_check_branch
        %248 = sbr.rel (%p246) target = $region16
      $region15: #{discriminator_forward.1} parent=11 // pred_region
        _
      $region16: #{discriminator_forward.1} parent=11 // pred_fallthru
        _
      // Predicated region
      $region17: #{discriminator_forward.1} parent=11 // pred_check
        %p249 = pneg %p98
      $region18: #{discriminator_forward.1} parent=11 // pred_check_branch
        %251 = sbr.rel (%p249) target = $region20
      $region19: #{discriminator_forward.1} parent=11 // pred_region
        _
      $region20: #{discriminator_forward.1} parent=11 // pred_fallthru
        _
      // Predicated region
      $region21: #{discriminator_forward.1} parent=11 // pred_check
        %p252 = pneg %p119
      $region22: #{discriminator_forward.1} parent=11 // pred_check_branch
        %254 = sbr.rel (%p252) target = $region24
      $region23: #{discriminator_forward.1} parent=11 // pred_region
        _
      $region24: #{discriminator_forward.1} parent=11 // pred_fallthru
        _
      // Predicated region
      $region25: #{discriminator_forward.1} parent=11 // pred_check
        %p255 = pneg %p140
      $region26: #{discriminator_forward.1} parent=11 // pred_check_branch
        %257 = sbr.rel (%p255) target = $region28
      $region27: #{discriminator_forward.1} parent=11 // pred_region
        _
      $region28: #{discriminator_forward.1} parent=11 // pred_fallthru
        _
      // Predicated region
      $region29: #{discriminator_forward.1} parent=11 // pred_check
        %p258 = pneg %p161
      $region30: #{discriminator_forward.1} parent=11 // pred_check_branch
        %260 = sbr.rel (%p258) target = $region32
      $region31: #{discriminator_forward.1} parent=11 // pred_region
        _
      $region32: #{discriminator_forward.1} parent=11 // pred_fallthru
        _
      // Predicated region
      $region33: #{discriminator_forward.1} parent=11 // pred_check
        %p261 = pneg %p182
      $region34: #{discriminator_forward.1} parent=11 // pred_check_branch
        %263 = sbr.rel (%p261) target = $region36
      $region35: #{discriminator_forward.1} parent=11 // pred_region
        _
      $region36: #{discriminator_forward.1} parent=11 // pred_fallthru
        _
      // Predicated region
      $region37: #{discriminator_forward.1} parent=11 // pred_check
        %p264 = pneg %p203
      $region38: #{discriminator_forward.1} parent=11 // pred_check_branch
        %266 = sbr.rel (%p264) target = $region40
      $region39: #{discriminator_forward.1} parent=11 // pred_region
        _
      $region40: #{discriminator_forward.1} parent=11 // pred_fallthru
        _
    $region12: #{discriminator_forward.1} parent=5 // pred_fallthru
      _
    %p267 = scmp.lt.s32.totalorder %s14, 2
    // Predicated region
    $region41: #{discriminator_forward.1} parent=5 // pred_check
      %p268 = pneg %p267
    $region42: #{discriminator_forward.1} parent=5 // pred_check_branch
      %270 = sbr.rel (%p268) target = $region44
    $region43: #{discriminator_forward.1} parent=5 // pred_region
      // Predicated region
      $region45: #{discriminator_forward.1} parent=43 // pred_check
        %p271 = pneg %p50
      $region46: #{discriminator_forward.1} parent=43 // pred_check_branch
        %273 = sbr.rel (%p271) target = $region48
      $region47: #{discriminator_forward.1} parent=43 // pred_region
        %s274 = ssub.s32 1, %s21
        %s275 = smul.u32 %s22, %s274
        %s276 = smul.u32 4, %s275
        %s277 = ssub.s32 1, %s276
        %s278 = smul.u32 32, %s277
        %s279 = smul.u32 %s278, 7
        %p280 = scmp.lt.s32.totalorder %s276, 0
        %s281 = scalar_select %p280, %s276, 0
        %s282 = smul.addr %s281, 7
        %s283 = smul.addr %s282, 2
        %s284 = scalar_lea.vmem %s0, %s283
        %s285 = ssub.s32 1, %s21
        %s286 = smul.u32 %s22, %s285
        %s287 = smul.u32 4, %s286
        %s288 = ssub.s32 1, %s287
        %s289 = smul.u32 32, %s288
        %s290 = smul.u32 %s289, 7
      $region48: #{discriminator_forward.1} parent=43 // pred_fallthru
        _
    $region44: #{discriminator_forward.1} parent=5 // pred_fallthru
      _
    %p291 = scmp.le.s32.totalorder 1, %s14
    %p292 = scmp.lt.s32.totalorder %s14, 3
    %p293 = pnand %p291, %p292
    %p294 = pneg %p293
    // Predicated region
    $region49: #{discriminator_forward.1} parent=5 // pred_check
      _
    $region50: #{discriminator_forward.1} parent=5 // pred_check_branch
      %296 = sbr.rel (%p293) target = $region52
    $region51: #{discriminator_forward.1} parent=5 // pred_region
      %s297 = ssub.s32 %s14, 1
      %s298 = ssub.s32 1, %s23
      %s299 = smul.u32 %s24, %s298
      %s300 = smul.u32 4, %s299
      %s301 = ssub.s32 1, %s300
      %s302 = smul.u32 32, %s301
      %s303 = smul.u32 %s302, 7
      %p304 = scmp.lt.s32.totalorder %s300, 0
      %s305 = scalar_select %p304, %s300, 0
      %s306 = smul.addr %s305, 7
      %s307 = smul.addr %s306, 2
      %s308 = scalar_lea.vmem %s0, %s307
      %p309 = pneg %p56
      %p310 = pneg %p53
      %p311 = pneg %p77
      %p312 = pneg %p74
      %p313 = pneg %p98
      %p314 = pneg %p95
      %p315 = pneg %p119
      %p316 = pneg %p116
      %p317 = pneg %p140
      %p318 = pneg %p137
      %p319 = pneg %p161
      %p320 = pneg %p158
      %p321 = pneg %p182
      %p322 = pneg %p179
      %p323 = pneg %p203
      %p324 = pneg %p200
      %p325 = pneg %p231
      %p326 = pneg %p228
      %s327 = smul.u32 %s24, %s23
      %p328 = scmp.lt.s32.totalorder %s327, 0
      %s329 = scalar_select %p328, %s327, 0
      %s330 = smul.addr %s329, 8
      %s331 = scalar_lea.vmem %s8, %s330
      %s332 = ssub.s32 1, %s23
      %s333 = smul.u32 %s24, %s332
      %s334 = smul.u32 4, %s333
      %s335 = ssub.s32 1, %s334
      %s336 = smul.u32 32, %s335
      %s337 = smul.u32 %s336, 7
      %p338 = scmp.lt.s32.totalorder %s334, 0
      %s339 = scalar_select %p338, %s334, 0
      %s340 = smul.addr %s339, 7
      %s341 = smul.addr %s340, 2
      %s342 = scalar_lea.vmem %s0, %s341
      %s343 = ssub.s32 1, %s23
      %s344 = smul.u32 %s24, %s343
      %s345 = smul.u32 4, %s344
      %s346 = ssub.s32 1, %s345
      %s347 = smul.u32 32, %s346
      %s348 = smul.u32 %s347, 7
      %s349 = smul.u32 %s24, %s23
      %p350 = scmp.lt.s32.totalorder %s349, 0
      %s351 = scalar_select %p350, %s349, 0
      %s352 = smul.addr %s351, 8
      %s353 = scalar_lea.vmem %s8, %s352
      %s354 = smul.u32 %s24, %s23
      %p356 = scmp.eq.s32.totalorder %s23, 0
      %p357 = scmp.eq.s32.totalorder %s24, 0
      %p358 = pnand %p356, %p357
      %p359 = pneg %p358
      // Predicated region
      $region53: #{discriminator_forward.1} parent=51 // pred_check
        _
      $region54: #{discriminator_forward.1} parent=51 // pred_check_branch
        %361 = sbr.rel (%p358) target = $region56
      $region55: #{discriminator_forward.1} parent=51 // pred_region
        %v362 = vlaneseq
        %vm363 = vcmp.ge.s32.totalorder %v362, 0
        %vm364 = vcmp.lt.s32.totalorder %v362, 224
        %vm365 = vmand %vm363, %vm364
        %366 = vst.msk [vmem:[#allocation3] sm:$0x3] %vm365, 0.0
        %367 = vst.msk [vmem:[#allocation4] sm:$0x3] %vm365, 0.0
      $region56: #{discriminator_forward.1} parent=51 // pred_fallthru
        _
      // Predicated region
      $region57: #{discriminator_forward.1} parent=51 // pred_check
        %p368 = pneg %p356
      $region58: #{discriminator_forward.1} parent=51 // pred_check_branch
        %370 = sbr.rel (%p368) target = $region60
      $region59: #{discriminator_forward.1} parent=51 // pred_region
        %v371 = vld [vmem:[%s342] sm:$0xff]
        %v372 = vld [vmem:[%s342 + $0x8] sm:$0x3f]
        %v373 = vld [vmem:[%s342 + $0xe] sm:$0xff]
        %v374 = vld [vmem:[%s342 + $0x16] sm:$0x3f]
        %v375 = vld [vmem:[%s342 + $0x1c] sm:$0xff]
        %v376 = vld [vmem:[%s342 + $0x24] sm:$0x3f]
        %v377 = vld [vmem:[%s342 + $0x2a] sm:$0xff]
        %v378 = vld [vmem:[%s342 + $0x32] sm:$0x3f]
        %v387 = vcombine.low %v371, %v373
        %v388 = vcombine.high %v371, %v373
        %v389 = vcombine.low %v375, %v377
        %v390 = vcombine.high %v375, %v377
        %v392 = vunpack.c.l.s4 1983009808
        %v393 = vunpack.c.0.s8 %v392
        %v394 = vlaneseq
        %v395 = vshrl.u32 %v394, 7
        %v396 = vsub.s32 %v393, %v395
        %v397 = vrot.slane %v387, %v396
        %v399 = vunpack.c.l.s4 1983009808
        %v400 = vunpack.c.0.s8 %v399
        %v401 = vlaneseq
        %v402 = vshrl.u32 %v401, 7
        %v403 = vsub.s32 %v400, %v402
        %v404 = vrot.slane %v388, %v403
        %v406 = vunpack.c.l.s4 1983009808
        %v407 = vunpack.c.0.s8 %v406
        %v408 = vlaneseq
        %v409 = vshrl.u32 %v408, 7
        %v410 = vsub.s32 %v407, %v409
        %v411 = vrot.slane %v389, %v410
        %v413 = vunpack.c.l.s4 1983009808
        %v414 = vunpack.c.0.s8 %v413
        %v415 = vlaneseq
        %v416 = vshrl.u32 %v415, 7
        %v417 = vsub.s32 %v414, %v416
        %v418 = vrot.slane %v390, %v417
        %v419 = vcombine.low %v397, %v411
        %v420 = vcombine.high %v397, %v411
        %v421 = vcombine.low %v404, %v418
        %v422 = vcombine.high %v404, %v418
        %v423 = vcombine.low %v372, %v374
        %v424 = vcombine.high %v372, %v374
        %v425 = vcombine.low %v376, %v378
        %v426 = vcombine.high %v376, %v378
        %v428 = vunpack.c.l.s4 1983009808
        %v429 = vunpack.c.0.s8 %v428
        %v430 = vlaneseq
        %v431 = vshrl.u32 %v430, 7
        %v432 = vsub.s32 %v429, %v431
        %v433 = vrot.slane %v423, %v432
        %v435 = vunpack.c.l.s4 1983009808
        %v436 = vunpack.c.0.s8 %v435
        %v437 = vlaneseq
        %v438 = vshrl.u32 %v437, 7
        %v439 = vsub.s32 %v436, %v438
        %v440 = vrot.slane %v424, %v439
        %v442 = vunpack.c.l.s4 1983009808
        %v443 = vunpack.c.0.s8 %v442
        %v444 = vlaneseq
        %v445 = vshrl.u32 %v444, 7
        %v446 = vsub.s32 %v443, %v445
        %v447 = vrot.slane %v425, %v446
        %v449 = vunpack.c.l.s4 1983009808
        %v450 = vunpack.c.0.s8 %v449
        %v451 = vlaneseq
        %v452 = vshrl.u32 %v451, 7
        %v453 = vsub.s32 %v450, %v452
        %v454 = vrot.slane %v426, %v453
        %v455 = vcombine.low %v433, %v447
        %v456 = vcombine.high %v433, %v447
        %v457 = vcombine.low %v440, %v454
        %v465 = vpack.c.bf16 %v419, %v419
        %v466 = vpack.c.bf16 %v420, %v420
        %v467 = vpack.c.bf16 %v421, %v421
        %v468 = vpack.c.bf16 %v422, %v422
        %v469 = vpack.c.bf16 %v455, %v455
        %v470 = vpack.c.bf16 %v456, %v456
        %v471 = vpack.c.bf16 %v457, %v457
        %v472 = vld [vmem:[%s1] sm:$0xff]
        %v473 = vld [vmem:[%s1 + $0x8] sm:$0xff]
        %v474 = vld [vmem:[%s1 + $0x10] sm:$0xff]
        %v475 = vld [vmem:[%s1 + $0x18] sm:$0xff]
        %v476 = vld [vmem:[%s1 + $0x20] sm:$0xff]
        %v477 = vld [vmem:[%s1 + $0x28] sm:$0xff]
        %v478 = vld [vmem:[%s1 + $0x30] sm:$0xff]
        %v479 = vld [vmem:[%s1 + $0x38] sm:$0xff]
        %v480 = vld [vmem:[%s1 + $0x40] sm:$0xff]
        %v481 = vld [vmem:[%s1 + $0x48] sm:$0xff]
        %v482 = vld [vmem:[%s1 + $0x50] sm:$0xff]
        %v483 = vld [vmem:[%s1 + $0x58] sm:$0xff]
        %v484 = vld [vmem:[%s1 + $0x60] sm:$0xff]
        %v485 = vld [vmem:[%s1 + $0x68] sm:$0xff]
        %v486 = vld [vmem:[%s1 + $0x70] sm:$0xff]
        %v487 = vld [vmem:[%s1 + $0x78] sm:$0xff]
        %v488 = vld [vmem:[%s1 + $0x80] sm:$0xff]
        %v489 = vld [vmem:[%s1 + $0x88] sm:$0xff]
        %v490 = vld [vmem:[%s1 + $0x90] sm:$0xff]
        %v491 = vld [vmem:[%s1 + $0x98] sm:$0xff]
        %v492 = vld [vmem:[%s1 + $0xa0] sm:$0xff]
        %v493 = vld [vmem:[%s1 + $0xa8] sm:$0xff]
        %v494 = vld [vmem:[%s1 + $0xb0] sm:$0xff]
        %v495 = vld [vmem:[%s1 + $0xb8] sm:$0xff]
        %v496 = vld [vmem:[%s1 + $0xc0] sm:$0xff]
        %v497 = vld [vmem:[%s1 + $0xc8] sm:$0xff]
        %v498 = vld [vmem:[%s1 + $0xd0] sm:$0xff]
        %v499 = vld [vmem:[%s1 + $0xd8] sm:$0xff]
        %v500 = vld [vmem:[%s1 + $0xe0] sm:$0xff]
        %v501 = vld [vmem:[%s1 + $0xe8] sm:$0xff]
        %v502 = vld [vmem:[%s1 + $0xf0] sm:$0xff]
        %v503 = vld [vmem:[%s1 + $0xf8] sm:$0xff]
        %v504 = vld [vmem:[%s1 + $0x100] sm:$0xff]
        %v505 = vld [vmem:[%s1 + $0x108] sm:$0xff]
        %v506 = vld [vmem:[%s1 + $0x110] sm:$0xff]
        %v507 = vld [vmem:[%s1 + $0x118] sm:$0xff]
        %v508 = vld [vmem:[%s1 + $0x120] sm:$0xff]
        %v509 = vld [vmem:[%s1 + $0x128] sm:$0xff]
        %v510 = vld [vmem:[%s1 + $0x130] sm:$0xff]
        %v511 = vld [vmem:[%s1 + $0x138] sm:$0xff]
        %v512 = vld [vmem:[%s1 + $0x140] sm:$0xff]
        %v513 = vld [vmem:[%s1 + $0x148] sm:$0xff]
        %v514 = vld [vmem:[%s1 + $0x150] sm:$0xff]
        %v515 = vld [vmem:[%s1 + $0x158] sm:$0xff]
        %v516 = vld [vmem:[%s1 + $0x160] sm:$0xff]
        %v517 = vld [vmem:[%s1 + $0x168] sm:$0xff]
        %v518 = vld [vmem:[%s1 + $0x170] sm:$0xff]
        %v519 = vld [vmem:[%s1 + $0x178] sm:$0xff]
        %v520 = vld [vmem:[%s1 + $0x180] sm:$0xff]
        %v521 = vld [vmem:[%s1 + $0x188] sm:$0xff]
        %v522 = vld [vmem:[%s1 + $0x190] sm:$0xff]
        %v523 = vld [vmem:[%s1 + $0x198] sm:$0xff]
        %v524 = vld [vmem:[%s1 + $0x1a0] sm:$0xff]
        %v525 = vld [vmem:[%s1 + $0x1a8] sm:$0xff]
        %v526 = vld [vmem:[%s1 + $0x1b0] sm:$0xff]
        %v527 = vld [vmem:[%s1 + $0x1b8] sm:$0xff]
        %v528 = vld [vmem:[%s1 + $0x1c0] sm:$0xff]
        %v529 = vld [vmem:[%s1 + $0x1c8] sm:$0xff]
        %v530 = vld [vmem:[%s1 + $0x1d0] sm:$0xff]
        %v531 = vld [vmem:[%s1 + $0x1d8] sm:$0xff]
        %v532 = vld [vmem:[%s1 + $0x1e0] sm:$0xff]
        %v533 = vld [vmem:[%s1 + $0x1e8] sm:$0xff]
        %v534 = vld [vmem:[%s1 + $0x1f0] sm:$0xff]
        %v535 = vld [vmem:[%s1 + $0x1f8] sm:$0xff]
        %v536 = vld [vmem:[%s1 + $0x200] sm:$0xff]
        %v537 = vld [vmem:[%s1 + $0x208] sm:$0xff]
        %v538 = vld [vmem:[%s1 + $0x210] sm:$0xff]
        %v539 = vld [vmem:[%s1 + $0x218] sm:$0xff]
        %v540 = vld [vmem:[%s1 + $0x220] sm:$0xff]
        %v541 = vld [vmem:[%s1 + $0x228] sm:$0xff]
        %v542 = vld [vmem:[%s1 + $0x230] sm:$0xff]
        %v543 = vld [vmem:[%s1 + $0x238] sm:$0xff]
        %v544 = vld [vmem:[%s1 + $0x240] sm:$0xff]
        %v545 = vld [vmem:[%s1 + $0x248] sm:$0xff]
        %v546 = vld [vmem:[%s1 + $0x250] sm:$0xff]
        %v547 = vld [vmem:[%s1 + $0x258] sm:$0xff]
        %v548 = vld [vmem:[%s1 + $0x260] sm:$0xff]
        %v549 = vld [vmem:[%s1 + $0x268] sm:$0xff]
        %v550 = vld [vmem:[%s1 + $0x270] sm:$0xff]
        %v551 = vld [vmem:[%s1 + $0x278] sm:$0xff]
        %v552 = vld [vmem:[%s1 + $0x280] sm:$0xff]
        %v553 = vld [vmem:[%s1 + $0x288] sm:$0xff]
        %v554 = vld [vmem:[%s1 + $0x290] sm:$0xff]
        %v555 = vld [vmem:[%s1 + $0x298] sm:$0xff]
        %v556 = vld [vmem:[%s1 + $0x2a0] sm:$0xff]
        %v557 = vld [vmem:[%s1 + $0x2a8] sm:$0xff]
        %v558 = vld [vmem:[%s1 + $0x2b0] sm:$0xff]
        %v559 = vld [vmem:[%s1 + $0x2b8] sm:$0xff]
        %v560 = vld [vmem:[%s1 + $0x2c0] sm:$0xff]
        %v561 = vld [vmem:[%s1 + $0x2c8] sm:$0xff]
        %v562 = vld [vmem:[%s1 + $0x2d0] sm:$0xff]
        %v563 = vld [vmem:[%s1 + $0x2d8] sm:$0xff]
        %v564 = vld [vmem:[%s1 + $0x2e0] sm:$0xff]
        %v565 = vld [vmem:[%s1 + $0x2e8] sm:$0xff]
        %v566 = vld [vmem:[%s1 + $0x2f0] sm:$0xff]
        %v567 = vld [vmem:[%s1 + $0x2f8] sm:$0xff]
        %v568 = vld [vmem:[%s1 + $0x300] sm:$0xff]
        %v569 = vld [vmem:[%s1 + $0x308] sm:$0xff]
        %v570 = vld [vmem:[%s1 + $0x310] sm:$0xff]
        %v571 = vld [vmem:[%s1 + $0x318] sm:$0xff]
        %v572 = vld [vmem:[%s1 + $0x320] sm:$0xff]
        %v573 = vld [vmem:[%s1 + $0x328] sm:$0xff]
        %v574 = vld [vmem:[%s1 + $0x330] sm:$0xff]
        %v575 = vld [vmem:[%s1 + $0x338] sm:$0xff]
        %v576 = vld [vmem:[%s1 + $0x340] sm:$0xff]
        %v577 = vld [vmem:[%s1 + $0x348] sm:$0xff]
        %v578 = vld [vmem:[%s1 + $0x350] sm:$0xff]
        %v579 = vld [vmem:[%s1 + $0x358] sm:$0xff]
        %v580 = vld [vmem:[%s1 + $0x360] sm:$0xff]
        %v581 = vld [vmem:[%s1 + $0x368] sm:$0xff]
        %v582 = vld [vmem:[%s1 + $0x370] sm:$0xff]
        %v583 = vld [vmem:[%s1 + $0x378] sm:$0xff]
        %v584 = vld [vmem:[%s1 + $0x380] sm:$0xff]
        %v585 = vld [vmem:[%s1 + $0x388] sm:$0xff]
        %v586 = vld [vmem:[%s1 + $0x390] sm:$0xff]
        %v587 = vld [vmem:[%s1 + $0x398] sm:$0xff]
        %v588 = vld [vmem:[%s1 + $0x3a0] sm:$0xff]
        %v589 = vld [vmem:[%s1 + $0x3a8] sm:$0xff]
        %v590 = vld [vmem:[%s1 + $0x3b0] sm:$0xff]
        %v591 = vld [vmem:[%s1 + $0x3b8] sm:$0xff]
        %v592 = vld [vmem:[%s1 + $0x3c0] sm:$0xff]
        %v593 = vld [vmem:[%s1 + $0x3c8] sm:$0xff]
        %v594 = vld [vmem:[%s1 + $0x3d0] sm:$0xff]
        %v595 = vld [vmem:[%s1 + $0x3d8] sm:$0xff]
        %v596 = vld [vmem:[%s1 + $0x3e0] sm:$0xff]
        %v597 = vld [vmem:[%s1 + $0x3e8] sm:$0xff]
        %v598 = vld [vmem:[%s1 + $0x3f0] sm:$0xff]
        %v599 = vld [vmem:[%s1 + $0x3f8] sm:$0xff]
        %v600 = vld [vmem:[%s1 + $0x400] sm:$0xff]
        %v601 = vld [vmem:[%s1 + $0x408] sm:$0xff]
        %v602 = vld [vmem:[%s1 + $0x410] sm:$0xff]
        %v603 = vld [vmem:[%s1 + $0x418] sm:$0xff]
        %v604 = vld [vmem:[%s1 + $0x420] sm:$0xff]
        %v605 = vld [vmem:[%s1 + $0x428] sm:$0xff]
        %v606 = vld [vmem:[%s1 + $0x430] sm:$0xff]
        %v607 = vld [vmem:[%s1 + $0x438] sm:$0xff]
        %v608 = vld [vmem:[%s1 + $0x440] sm:$0xff]
        %v609 = vld [vmem:[%s1 + $0x448] sm:$0xff]
        %v610 = vld [vmem:[%s1 + $0x450] sm:$0xff]
        %v611 = vld [vmem:[%s1 + $0x458] sm:$0xff]
        %v612 = vld [vmem:[%s1 + $0x460] sm:$0xff]
        %v613 = vld [vmem:[%s1 + $0x468] sm:$0xff]
        %v614 = vld [vmem:[%s1 + $0x470] sm:$0xff]
        %v615 = vld [vmem:[%s1 + $0x478] sm:$0xff]
        %v616 = vld [vmem:[%s1 + $0x480] sm:$0xff]
        %v617 = vld [vmem:[%s1 + $0x488] sm:$0xff]
        %v618 = vld [vmem:[%s1 + $0x490] sm:$0xff]
        %v619 = vld [vmem:[%s1 + $0x498] sm:$0xff]
        %v620 = vld [vmem:[%s1 + $0x4a0] sm:$0xff]
        %v621 = vld [vmem:[%s1 + $0x4a8] sm:$0xff]
        %v622 = vld [vmem:[%s1 + $0x4b0] sm:$0xff]
        %v623 = vld [vmem:[%s1 + $0x4b8] sm:$0xff]
        %v624 = vld [vmem:[%s1 + $0x4c0] sm:$0xff]
        %v625 = vld [vmem:[%s1 + $0x4c8] sm:$0xff]
        %v626 = vld [vmem:[%s1 + $0x4d0] sm:$0xff]
        %v627 = vld [vmem:[%s1 + $0x4d8] sm:$0xff]
        %v628 = vld [vmem:[%s1 + $0x4e0] sm:$0xff]
        %v629 = vld [vmem:[%s1 + $0x4e8] sm:$0xff]
        %v630 = vld [vmem:[%s1 + $0x4f0] sm:$0xff]
        %v631 = vld [vmem:[%s1 + $0x4f8] sm:$0xff]
        %v632 = vld [vmem:[%s1 + $0x500] sm:$0xff]
        %v633 = vld [vmem:[%s1 + $0x508] sm:$0xff]
        %v634 = vld [vmem:[%s1 + $0x510] sm:$0xff]
        %v635 = vld [vmem:[%s1 + $0x518] sm:$0xff]
        %v636 = vld [vmem:[%s1 + $0x520] sm:$0xff]
        %v637 = vld [vmem:[%s1 + $0x528] sm:$0xff]
        %v638 = vld [vmem:[%s1 + $0x530] sm:$0xff]
        %v639 = vld [vmem:[%s1 + $0x538] sm:$0xff]
        %v640 = vld [vmem:[%s1 + $0x540] sm:$0xff]
        %v641 = vld [vmem:[%s1 + $0x548] sm:$0xff]
        %v642 = vld [vmem:[%s1 + $0x550] sm:$0xff]
        %v643 = vld [vmem:[%s1 + $0x558] sm:$0xff]
        %v644 = vld [vmem:[%s1 + $0x560] sm:$0xff]
        %v645 = vld [vmem:[%s1 + $0x568] sm:$0xff]
        %v646 = vld [vmem:[%s1 + $0x570] sm:$0xff]
        %v647 = vld [vmem:[%s1 + $0x578] sm:$0xff]
        %v648 = vld [vmem:[%s1 + $0x580] sm:$0xff]
        %v649 = vld [vmem:[%s1 + $0x588] sm:$0xff]
        %v650 = vld [vmem:[%s1 + $0x590] sm:$0xff]
        %v651 = vld [vmem:[%s1 + $0x598] sm:$0xff]
        %v652 = vld [vmem:[%s1 + $0x5a0] sm:$0xff]
        %v653 = vld [vmem:[%s1 + $0x5a8] sm:$0xff]
        %v654 = vld [vmem:[%s1 + $0x5b0] sm:$0xff]
        %v655 = vld [vmem:[%s1 + $0x5b8] sm:$0xff]
        %v656 = vld [vmem:[%s1 + $0x5c0] sm:$0xff]
        %v657 = vld [vmem:[%s1 + $0x5c8] sm:$0xff]
        %v658 = vld [vmem:[%s1 + $0x5d0] sm:$0xff]
        %v659 = vld [vmem:[%s1 + $0x5d8] sm:$0xff]
        %v660 = vld [vmem:[%s1 + $0x5e0] sm:$0xff]
        %v661 = vld [vmem:[%s1 + $0x5e8] sm:$0xff]
        %v662 = vld [vmem:[%s1 + $0x5f0] sm:$0xff]
        %v663 = vld [vmem:[%s1 + $0x5f8] sm:$0xff]
        %v664 = vld [vmem:[%s1 + $0x600] sm:$0xff]
        %v665 = vld [vmem:[%s1 + $0x608] sm:$0xff]
        %v666 = vld [vmem:[%s1 + $0x610] sm:$0xff]
        %v667 = vld [vmem:[%s1 + $0x618] sm:$0xff]
        %v864 = vunpack.c.l.b16 %v472
        %v865 = vunpack.c.h.b16 %v472
        %v866 = vunpack.c.l.b16 %v473
        %v867 = vunpack.c.h.b16 %v473
        %v868 = vunpack.c.l.b16 %v474
        %v869 = vunpack.c.h.b16 %v474
        %v870 = vunpack.c.l.b16 %v475
        %v871 = vunpack.c.h.b16 %v475
        %v872 = vunpack.c.l.b16 %v476
        %v873 = vunpack.c.h.b16 %v476
        %v874 = vunpack.c.l.b16 %v477
        %v875 = vunpack.c.h.b16 %v477
        %v876 = vunpack.c.l.b16 %v478
        %v877 = vunpack.c.h.b16 %v478
        %v878 = vunpack.c.l.b16 %v479
        %v879 = vunpack.c.h.b16 %v479
        %v880 = vunpack.c.l.b16 %v480
        %v881 = vunpack.c.h.b16 %v480
        %v882 = vunpack.c.l.b16 %v481
        %v883 = vunpack.c.h.b16 %v481
        %v884 = vunpack.c.l.b16 %v482
        %v885 = vunpack.c.h.b16 %v482
        %v886 = vunpack.c.l.b16 %v483
        %v887 = vunpack.c.h.b16 %v483
        %v888 = vunpack.c.l.b16 %v484
        %v889 = vunpack.c.h.b16 %v484
        %v890 = vunpack.c.l.b16 %v485
        %v891 = vunpack.c.h.b16 %v485
        %v892 = vunpack.c.l.b16 %v486
        %v893 = vunpack.c.h.b16 %v486
        %v894 = vunpack.c.l.b16 %v487
        %v895 = vunpack.c.h.b16 %v487
        %v896 = vunpack.c.l.b16 %v488
        %v897 = vunpack.c.h.b16 %v488
        %v898 = vunpack.c.l.b16 %v489
        %v899 = vunpack.c.h.b16 %v489
        %v900 = vunpack.c.l.b16 %v490
        %v901 = vunpack.c.h.b16 %v490
        %v902 = vunpack.c.l.b16 %v491
        %v903 = vunpack.c.h.b16 %v491
        %v904 = vunpack.c.l.b16 %v492
        %v905 = vunpack.c.h.b16 %v492
        %v906 = vunpack.c.l.b16 %v493
        %v907 = vunpack.c.h.b16 %v493
        %v908 = vunpack.c.l.b16 %v494
        %v909 = vunpack.c.h.b16 %v494
        %v910 = vunpack.c.l.b16 %v495
        %v911 = vunpack.c.h.b16 %v495
        %v912 = vunpack.c.l.b16 %v496
        %v913 = vunpack.c.h.b16 %v496
        %v914 = vunpack.c.l.b16 %v497
        %v915 = vunpack.c.h.b16 %v497
        %v916 = vunpack.c.l.b16 %v498
        %v917 = vunpack.c.h.b16 %v498
        %v918 = vunpack.c.l.b16 %v499
        %v919 = vunpack.c.h.b16 %v499
        %v920 = vunpack.c.l.b16 %v500
        %v921 = vunpack.c.h.b16 %v500
        %v922 = vunpack.c.l.b16 %v501
        %v923 = vunpack.c.h.b16 %v501
        %v924 = vunpack.c.l.b16 %v502
        %v925 = vunpack.c.h.b16 %v502
        %v926 = vunpack.c.l.b16 %v503
        %v927 = vunpack.c.h.b16 %v503
        %v928 = vunpack.c.l.b16 %v504
        %v929 = vunpack.c.h.b16 %v504
        %v930 = vunpack.c.l.b16 %v505
        %v931 = vunpack.c.h.b16 %v505
        %v932 = vunpack.c.l.b16 %v506
        %v933 = vunpack.c.h.b16 %v506
        %v934 = vunpack.c.l.b16 %v507
        %v935 = vunpack.c.h.b16 %v507
        %v936 = vunpack.c.l.b16 %v508
        %v937 = vunpack.c.h.b16 %v508
        %v938 = vunpack.c.l.b16 %v509
        %v939 = vunpack.c.h.b16 %v509
        %v940 = vunpack.c.l.b16 %v510
        %v941 = vunpack.c.h.b16 %v510
        %v942 = vunpack.c.l.b16 %v511
        %v943 = vunpack.c.h.b16 %v511
        %v944 = vunpack.c.l.b16 %v512
        %v945 = vunpack.c.h.b16 %v512
        %v946 = vunpack.c.l.b16 %v513
        %v947 = vunpack.c.h.b16 %v513
        %v948 = vunpack.c.l.b16 %v514
        %v949 = vunpack.c.h.b16 %v514
        %v950 = vunpack.c.l.b16 %v515
        %v951 = vunpack.c.h.b16 %v515
        %v952 = vunpack.c.l.b16 %v516
        %v953 = vunpack.c.h.b16 %v516
        %v954 = vunpack.c.l.b16 %v517
        %v955 = vunpack.c.h.b16 %v517
        %v956 = vunpack.c.l.b16 %v518
        %v957 = vunpack.c.h.b16 %v518
        %v958 = vunpack.c.l.b16 %v519
        %v959 = vunpack.c.h.b16 %v519
        %v960 = vunpack.c.l.b16 %v520
        %v961 = vunpack.c.h.b16 %v520
        %v962 = vunpack.c.l.b16 %v521
        %v963 = vunpack.c.h.b16 %v521
        %v964 = vunpack.c.l.b16 %v522
        %v965 = vunpack.c.h.b16 %v522
        %v966 = vunpack.c.l.b16 %v523
        %v967 = vunpack.c.h.b16 %v523
        %v968 = vunpack.c.l.b16 %v524
        %v969 = vunpack.c.h.b16 %v524
        %v970 = vunpack.c.l.b16 %v525
        %v971 = vunpack.c.h.b16 %v525
        %v972 = vunpack.c.l.b16 %v526
        %v973 = vunpack.c.h.b16 %v526
        %v974 = vunpack.c.l.b16 %v527
        %v975 = vunpack.c.h.b16 %v527
        %v976 = vunpack.c.l.b16 %v528
        %v977 = vunpack.c.h.b16 %v528
        %v978 = vunpack.c.l.b16 %v529
        %v979 = vunpack.c.h.b16 %v529
        %v980 = vunpack.c.l.b16 %v530
        %v981 = vunpack.c.h.b16 %v530
        %v982 = vunpack.c.l.b16 %v531
        %v983 = vunpack.c.h.b16 %v531
        %v984 = vunpack.c.l.b16 %v532
        %v985 = vunpack.c.h.b16 %v532
        %v986 = vunpack.c.l.b16 %v533
        %v987 = vunpack.c.h.b16 %v533
        %v988 = vunpack.c.l.b16 %v534
        %v989 = vunpack.c.h.b16 %v534
        %v990 = vunpack.c.l.b16 %v535
        %v991 = vunpack.c.h.b16 %v535
        %v992 = vunpack.c.l.b16 %v536
        %v993 = vunpack.c.h.b16 %v536
        %v994 = vunpack.c.l.b16 %v537
        %v995 = vunpack.c.h.b16 %v537
        %v996 = vunpack.c.l.b16 %v538
        %v997 = vunpack.c.h.b16 %v538
        %v998 = vunpack.c.l.b16 %v539
        %v999 = vunpack.c.h.b16 %v539
        %v1000 = vunpack.c.l.b16 %v540
        %v1001 = vunpack.c.h.b16 %v540
        %v1002 = vunpack.c.l.b16 %v541
        %v1003 = vunpack.c.h.b16 %v541
        %v1004 = vunpack.c.l.b16 %v542
        %v1005 = vunpack.c.h.b16 %v542
        %v1006 = vunpack.c.l.b16 %v543
        %v1007 = vunpack.c.h.b16 %v543
        %v1008 = vunpack.c.l.b16 %v544
        %v1009 = vunpack.c.h.b16 %v544
        %v1010 = vunpack.c.l.b16 %v545
        %v1011 = vunpack.c.h.b16 %v545
        %v1012 = vunpack.c.l.b16 %v546
        %v1013 = vunpack.c.h.b16 %v546
        %v1014 = vunpack.c.l.b16 %v547
        %v1015 = vunpack.c.h.b16 %v547
        %v1016 = vunpack.c.l.b16 %v548
        %v1017 = vunpack.c.h.b16 %v548
        %v1018 = vunpack.c.l.b16 %v549
        %v1019 = vunpack.c.h.b16 %v549
        %v1020 = vunpack.c.l.b16 %v550
        %v1021 = vunpack.c.h.b16 %v550
        %v1022 = vunpack.c.l.b16 %v551
        %v1023 = vunpack.c.h.b16 %v551
        %v1024 = vunpack.c.l.b16 %v552
        %v1025 = vunpack.c.h.b16 %v552
        %v1026 = vunpack.c.l.b16 %v553
        %v1027 = vunpack.c.h.b16 %v553
        %v1028 = vunpack.c.l.b16 %v554
        %v1029 = vunpack.c.h.b16 %v554
        %v1030 = vunpack.c.l.b16 %v555
        %v1031 = vunpack.c.h.b16 %v555
        %v1032 = vunpack.c.l.b16 %v556
        %v1033 = vunpack.c.h.b16 %v556
        %v1034 = vunpack.c.l.b16 %v557
        %v1035 = vunpack.c.h.b16 %v557
        %v1036 = vunpack.c.l.b16 %v558
        %v1037 = vunpack.c.h.b16 %v558
        %v1038 = vunpack.c.l.b16 %v559
        %v1039 = vunpack.c.h.b16 %v559
        %v1040 = vunpack.c.l.b16 %v560
        %v1041 = vunpack.c.h.b16 %v560
        %v1042 = vunpack.c.l.b16 %v561
        %v1043 = vunpack.c.h.b16 %v561
        %v1044 = vunpack.c.l.b16 %v562
        %v1045 = vunpack.c.h.b16 %v562
        %v1046 = vunpack.c.l.b16 %v563
        %v1047 = vunpack.c.h.b16 %v563
        %v1048 = vunpack.c.l.b16 %v564
        %v1049 = vunpack.c.h.b16 %v564
        %v1050 = vunpack.c.l.b16 %v565
        %v1051 = vunpack.c.h.b16 %v565
        %v1052 = vunpack.c.l.b16 %v566
        %v1053 = vunpack.c.h.b16 %v566
        %v1054 = vunpack.c.l.b16 %v567
        %v1055 = vunpack.c.h.b16 %v567
        %v1056 = vunpack.c.l.b16 %v568
        %v1057 = vunpack.c.h.b16 %v568
        %v1058 = vunpack.c.l.b16 %v569
        %v1059 = vunpack.c.h.b16 %v569
        %v1060 = vunpack.c.l.b16 %v570
        %v1061 = vunpack.c.h.b16 %v570
        %v1062 = vunpack.c.l.b16 %v571
        %v1063 = vunpack.c.h.b16 %v571
        %v1064 = vunpack.c.l.b16 %v572
        %v1065 = vunpack.c.h.b16 %v572
        %v1066 = vunpack.c.l.b16 %v573
        %v1067 = vunpack.c.h.b16 %v573
        %v1068 = vunpack.c.l.b16 %v574
        %v1069 = vunpack.c.h.b16 %v574
        %v1070 = vunpack.c.l.b16 %v575
        %v1071 = vunpack.c.h.b16 %v575
        %v1072 = vunpack.c.l.b16 %v576
        %v1073 = vunpack.c.h.b16 %v576
        %v1074 = vunpack.c.l.b16 %v577
        %v1075 = vunpack.c.h.b16 %v577
        %v1076 = vunpack.c.l.b16 %v578
        %v1077 = vunpack.c.h.b16 %v578
        %v1078 = vunpack.c.l.b16 %v579
        %v1079 = vunpack.c.h.b16 %v579
        %v1080 = vunpack.c.l.b16 %v580
        %v1081 = vunpack.c.h.b16 %v580
        %v1082 = vunpack.c.l.b16 %v581
        %v1083 = vunpack.c.h.b16 %v581
        %v1084 = vunpack.c.l.b16 %v582
        %v1085 = vunpack.c.h.b16 %v582
        %v1086 = vunpack.c.l.b16 %v583
        %v1087 = vunpack.c.h.b16 %v583
        %v1088 = vunpack.c.l.b16 %v584
        %v1089 = vunpack.c.h.b16 %v584
        %v1090 = vunpack.c.l.b16 %v585
        %v1091 = vunpack.c.h.b16 %v585
        %v1092 = vunpack.c.l.b16 %v586
        %v1093 = vunpack.c.h.b16 %v586
        %v1094 = vunpack.c.l.b16 %v587
        %v1095 = vunpack.c.h.b16 %v587
        %v1096 = vunpack.c.l.b16 %v588
        %v1097 = vunpack.c.h.b16 %v588
        %v1098 = vunpack.c.l.b16 %v589
        %v1099 = vunpack.c.h.b16 %v589
        %v1100 = vunpack.c.l.b16 %v590
        %v1101 = vunpack.c.h.b16 %v590
        %v1102 = vunpack.c.l.b16 %v591
        %v1103 = vunpack.c.h.b16 %v591
        %v1104 = vunpack.c.l.b16 %v592
        %v1105 = vunpack.c.h.b16 %v592
        %v1106 = vunpack.c.l.b16 %v593
        %v1107 = vunpack.c.h.b16 %v593
        %v1108 = vunpack.c.l.b16 %v594
        %v1109 = vunpack.c.h.b16 %v594
        %v1110 = vunpack.c.l.b16 %v595
        %v1111 = vunpack.c.h.b16 %v595
        %v1112 = vunpack.c.l.b16 %v596
        %v1113 = vunpack.c.h.b16 %v596
        %v1114 = vunpack.c.l.b16 %v597
        %v1115 = vunpack.c.h.b16 %v597
        %v1116 = vunpack.c.l.b16 %v598
        %v1117 = vunpack.c.h.b16 %v598
        %v1118 = vunpack.c.l.b16 %v599
        %v1119 = vunpack.c.h.b16 %v599
        %v1120 = vunpack.c.l.b16 %v600
        %v1121 = vunpack.c.h.b16 %v600
        %v1122 = vunpack.c.l.b16 %v601
        %v1123 = vunpack.c.h.b16 %v601
        %v1124 = vunpack.c.l.b16 %v602
        %v1125 = vunpack.c.h.b16 %v602
        %v1126 = vunpack.c.l.b16 %v603
        %v1127 = vunpack.c.h.b16 %v603
        %v1128 = vunpack.c.l.b16 %v604
        %v1129 = vunpack.c.h.b16 %v604
        %v1130 = vunpack.c.l.b16 %v605
        %v1131 = vunpack.c.h.b16 %v605
        %v1132 = vunpack.c.l.b16 %v606
        %v1133 = vunpack.c.h.b16 %v606
        %v1134 = vunpack.c.l.b16 %v607
        %v1135 = vunpack.c.h.b16 %v607
        %v1136 = vunpack.c.l.b16 %v608
        %v1137 = vunpack.c.h.b16 %v608
        %v1138 = vunpack.c.l.b16 %v609
        %v1139 = vunpack.c.h.b16 %v609
        %v1140 = vunpack.c.l.b16 %v610
        %v1141 = vunpack.c.h.b16 %v610
        %v1142 = vunpack.c.l.b16 %v611
        %v1143 = vunpack.c.h.b16 %v611
        %v1144 = vunpack.c.l.b16 %v612
        %v1145 = vunpack.c.h.b16 %v612
        %v1146 = vunpack.c.l.b16 %v613
        %v1147 = vunpack.c.h.b16 %v613
        %v1148 = vunpack.c.l.b16 %v614
        %v1149 = vunpack.c.h.b16 %v614
        %v1150 = vunpack.c.l.b16 %v615
        %v1151 = vunpack.c.h.b16 %v615
        %v1152 = vunpack.c.l.b16 %v616
        %v1153 = vunpack.c.h.b16 %v616
        %v1154 = vunpack.c.l.b16 %v617
        %v1155 = vunpack.c.h.b16 %v617
        %v1156 = vunpack.c.l.b16 %v618
        %v1157 = vunpack.c.h.b16 %v618
        %v1158 = vunpack.c.l.b16 %v619
        %v1159 = vunpack.c.h.b16 %v619
        %v1160 = vunpack.c.l.b16 %v620
        %v1161 = vunpack.c.h.b16 %v620
        %v1162 = vunpack.c.l.b16 %v621
        %v1163 = vunpack.c.h.b16 %v621
        %v1164 = vunpack.c.l.b16 %v622
        %v1165 = vunpack.c.h.b16 %v622
        %v1166 = vunpack.c.l.b16 %v623
        %v1167 = vunpack.c.h.b16 %v623
        %v1168 = vunpack.c.l.b16 %v624
        %v1169 = vunpack.c.h.b16 %v624
        %v1170 = vunpack.c.l.b16 %v625
        %v1171 = vunpack.c.h.b16 %v625
        %v1172 = vunpack.c.l.b16 %v626
        %v1173 = vunpack.c.h.b16 %v626
        %v1174 = vunpack.c.l.b16 %v627
        %v1175 = vunpack.c.h.b16 %v627
        %v1176 = vunpack.c.l.b16 %v628
        %v1177 = vunpack.c.h.b16 %v628
        %v1178 = vunpack.c.l.b16 %v629
        %v1179 = vunpack.c.h.b16 %v629
        %v1180 = vunpack.c.l.b16 %v630
        %v1181 = vunpack.c.h.b16 %v630
        %v1182 = vunpack.c.l.b16 %v631
        %v1183 = vunpack.c.h.b16 %v631
        %v1184 = vunpack.c.l.b16 %v632
        %v1185 = vunpack.c.h.b16 %v632
        %v1186 = vunpack.c.l.b16 %v633
        %v1187 = vunpack.c.h.b16 %v633
        %v1188 = vunpack.c.l.b16 %v634
        %v1189 = vunpack.c.h.b16 %v634
        %v1190 = vunpack.c.l.b16 %v635
        %v1191 = vunpack.c.h.b16 %v635
        %v1192 = vunpack.c.l.b16 %v636
        %v1193 = vunpack.c.h.b16 %v636
        %v1194 = vunpack.c.l.b16 %v637
        %v1195 = vunpack.c.h.b16 %v637
        %v1196 = vunpack.c.l.b16 %v638
        %v1197 = vunpack.c.h.b16 %v638
        %v1198 = vunpack.c.l.b16 %v639
        %v1199 = vunpack.c.h.b16 %v639
        %v1200 = vunpack.c.l.b16 %v640
        %v1201 = vunpack.c.h.b16 %v640
        %v1202 = vunpack.c.l.b16 %v641
        %v1203 = vunpack.c.h.b16 %v641
        %v1204 = vunpack.c.l.b16 %v642
        %v1205 = vunpack.c.h.b16 %v642
        %v1206 = vunpack.c.l.b16 %v643
        %v1207 = vunpack.c.h.b16 %v643
        %v1208 = vunpack.c.l.b16 %v644
        %v1209 = vunpack.c.h.b16 %v644
        %v1210 = vunpack.c.l.b16 %v645
        %v1211 = vunpack.c.h.b16 %v645
        %v1212 = vunpack.c.l.b16 %v646
        %v1213 = vunpack.c.h.b16 %v646
        %v1214 = vunpack.c.l.b16 %v647
        %v1215 = vunpack.c.h.b16 %v647
        %v1216 = vunpack.c.l.b16 %v648
        %v1217 = vunpack.c.h.b16 %v648
        %v1218 = vunpack.c.l.b16 %v649
        %v1219 = vunpack.c.h.b16 %v649
        %v1220 = vunpack.c.l.b16 %v650
        %v1221 = vunpack.c.h.b16 %v650
        %v1222 = vunpack.c.l.b16 %v651
        %v1223 = vunpack.c.h.b16 %v651
        %v1224 = vunpack.c.l.b16 %v652
        %v1225 = vunpack.c.h.b16 %v652
        %v1226 = vunpack.c.l.b16 %v653
        %v1227 = vunpack.c.h.b16 %v653
        %v1228 = vunpack.c.l.b16 %v654
        %v1229 = vunpack.c.h.b16 %v654
        %v1230 = vunpack.c.l.b16 %v655
        %v1231 = vunpack.c.h.b16 %v655
        %v1232 = vunpack.c.l.b16 %v656
        %v1233 = vunpack.c.h.b16 %v656
        %v1234 = vunpack.c.l.b16 %v657
        %v1235 = vunpack.c.h.b16 %v657
        %v1236 = vunpack.c.l.b16 %v658
        %v1237 = vunpack.c.h.b16 %v658
        %v1238 = vunpack.c.l.b16 %v659
        %v1239 = vunpack.c.h.b16 %v659
        %v1240 = vunpack.c.l.b16 %v660
        %v1241 = vunpack.c.h.b16 %v660
        %v1242 = vunpack.c.l.b16 %v661
        %v1243 = vunpack.c.h.b16 %v661
        %v1244 = vunpack.c.l.b16 %v662
        %v1245 = vunpack.c.h.b16 %v662
        %v1246 = vunpack.c.l.b16 %v663
        %v1247 = vunpack.c.h.b16 %v663
        %v1248 = vunpack.c.l.b16 %v664
        %v1249 = vunpack.c.h.b16 %v664
        %v1250 = vunpack.c.l.b16 %v665
        %v1251 = vunpack.c.h.b16 %v665
        %v1252 = vunpack.c.l.b16 %v666
        %v1253 = vunpack.c.h.b16 %v666
        %v1254 = vunpack.c.l.b16 %v667
        %v1255 = vunpack.c.h.b16 %v667
        %v1256 = vpack.c.b16 %v868, %v864
        %v1257 = vpack.c.b16 %v869, %v865
        %v1258 = vpack.c.b16 %v870, %v866
        %v1259 = vpack.c.b16 %v871, %v867
        %v1260 = vpack.c.b16 %v876, %v872
        %v1261 = vpack.c.b16 %v877, %v873
        %v1262 = vpack.c.b16 %v878, %v874
        %v1263 = vpack.c.b16 %v879, %v875
        %v1264 = vpack.c.b16 %v884, %v880
        %v1265 = vpack.c.b16 %v885, %v881
        %v1266 = vpack.c.b16 %v886, %v882
        %v1267 = vpack.c.b16 %v887, %v883
        %v1268 = vpack.c.b16 %v892, %v888
        %v1269 = vpack.c.b16 %v893, %v889
        %v1270 = vpack.c.b16 %v894, %v890
        %v1271 = vpack.c.b16 %v895, %v891
        %v1272 = vpack.c.b16 %v900, %v896
        %v1273 = vpack.c.b16 %v901, %v897
        %v1274 = vpack.c.b16 %v902, %v898
        %v1275 = vpack.c.b16 %v903, %v899
        %v1276 = vpack.c.b16 %v908, %v904
        %v1277 = vpack.c.b16 %v909, %v905
        %v1278 = vpack.c.b16 %v910, %v906
        %v1279 = vpack.c.b16 %v911, %v907
        %v1280 = vpack.c.b16 %v916, %v912
        %v1281 = vpack.c.b16 %v917, %v913
        %v1282 = vpack.c.b16 %v918, %v914
        %v1283 = vpack.c.b16 %v919, %v915
        %v1284 = vpack.c.b16 %v924, %v920
        %v1285 = vpack.c.b16 %v925, %v921
        %v1286 = vpack.c.b16 %v926, %v922
        %v1287 = vpack.c.b16 %v927, %v923
        %v1288 = vpack.c.b16 %v932, %v928
        %v1289 = vpack.c.b16 %v933, %v929
        %v1290 = vpack.c.b16 %v934, %v930
        %v1291 = vpack.c.b16 %v935, %v931
        %v1292 = vpack.c.b16 %v940, %v936
        %v1293 = vpack.c.b16 %v941, %v937
        %v1294 = vpack.c.b16 %v942, %v938
        %v1295 = vpack.c.b16 %v943, %v939
        %v1296 = vpack.c.b16 %v948, %v944
        %v1297 = vpack.c.b16 %v949, %v945
        %v1298 = vpack.c.b16 %v950, %v946
        %v1299 = vpack.c.b16 %v951, %v947
        %v1300 = vpack.c.b16 %v956, %v952
        %v1301 = vpack.c.b16 %v957, %v953
        %v1302 = vpack.c.b16 %v958, %v954
        %v1303 = vpack.c.b16 %v959, %v955
        %v1304 = vpack.c.b16 %v964, %v960
        %v1305 = vpack.c.b16 %v965, %v961
        %v1306 = vpack.c.b16 %v966, %v962
        %v1307 = vpack.c.b16 %v967, %v963
        %v1308 = vpack.c.b16 %v972, %v968
        %v1309 = vpack.c.b16 %v973, %v969
        %v1310 = vpack.c.b16 %v974, %v970
        %v1311 = vpack.c.b16 %v975, %v971
        %v1312 = vpack.c.b16 %v980, %v976
        %v1313 = vpack.c.b16 %v981, %v977
        %v1314 = vpack.c.b16 %v982, %v978
        %v1315 = vpack.c.b16 %v983, %v979
        %v1316 = vpack.c.b16 %v988, %v984
        %v1317 = vpack.c.b16 %v989, %v985
        %v1318 = vpack.c.b16 %v990, %v986
        %v1319 = vpack.c.b16 %v991, %v987
        %v1320 = vpack.c.b16 %v996, %v992
        %v1321 = vpack.c.b16 %v997, %v993
        %v1322 = vpack.c.b16 %v998, %v994
        %v1323 = vpack.c.b16 %v999, %v995
        %v1324 = vpack.c.b16 %v1004, %v1000
        %v1325 = vpack.c.b16 %v1005, %v1001
        %v1326 = vpack.c.b16 %v1006, %v1002
        %v1327 = vpack.c.b16 %v1007, %v1003
        %v1328 = vpack.c.b16 %v1012, %v1008
        %v1329 = vpack.c.b16 %v1013, %v1009
        %v1330 = vpack.c.b16 %v1014, %v1010
        %v1331 = vpack.c.b16 %v1015, %v1011
        %v1332 = vpack.c.b16 %v1020, %v1016
        %v1333 = vpack.c.b16 %v1021, %v1017
        %v1334 = vpack.c.b16 %v1022, %v1018
        %v1335 = vpack.c.b16 %v1023, %v1019
        %v1336 = vpack.c.b16 %v1028, %v1024
        %v1337 = vpack.c.b16 %v1029, %v1025
        %v1338 = vpack.c.b16 %v1030, %v1026
        %v1339 = vpack.c.b16 %v1031, %v1027
        %v1340 = vpack.c.b16 %v1036, %v1032
        %v1341 = vpack.c.b16 %v1037, %v1033
        %v1342 = vpack.c.b16 %v1038, %v1034
        %v1343 = vpack.c.b16 %v1039, %v1035
        %v1344 = vpack.c.b16 %v1044, %v1040
        %v1345 = vpack.c.b16 %v1045, %v1041
        %v1346 = vpack.c.b16 %v1046, %v1042
        %v1347 = vpack.c.b16 %v1047, %v1043
        %v1348 = vpack.c.b16 %v1052, %v1048
        %v1349 = vpack.c.b16 %v1053, %v1049
        %v1350 = vpack.c.b16 %v1054, %v1050
        %v1351 = vpack.c.b16 %v1055, %v1051
        %v1352 = vpack.c.b16 %v1060, %v1056
        %v1353 = vpack.c.b16 %v1061, %v1057
        %v1354 = vpack.c.b16 %v1062, %v1058
        %v1355 = vpack.c.b16 %v1063, %v1059
        %v1356 = vpack.c.b16 %v1068, %v1064
        %v1357 = vpack.c.b16 %v1069, %v1065
        %v1358 = vpack.c.b16 %v1070, %v1066
        %v1359 = vpack.c.b16 %v1071, %v1067
        %v1360 = vpack.c.b16 %v1076, %v1072
        %v1361 = vpack.c.b16 %v1077, %v1073
        %v1362 = vpack.c.b16 %v1078, %v1074
        %v1363 = vpack.c.b16 %v1079, %v1075
        %v1364 = vpack.c.b16 %v1084, %v1080
        %v1365 = vpack.c.b16 %v1085, %v1081
        %v1366 = vpack.c.b16 %v1086, %v1082
        %v1367 = vpack.c.b16 %v1087, %v1083
        %v1368 = vpack.c.b16 %v1092, %v1088
        %v1369 = vpack.c.b16 %v1093, %v1089
        %v1370 = vpack.c.b16 %v1094, %v1090
        %v1371 = vpack.c.b16 %v1095, %v1091
        %v1372 = vpack.c.b16 %v1100, %v1096
        %v1373 = vpack.c.b16 %v1101, %v1097
        %v1374 = vpack.c.b16 %v1102, %v1098
        %v1375 = vpack.c.b16 %v1103, %v1099
        %v1376 = vpack.c.b16 %v1108, %v1104
        %v1377 = vpack.c.b16 %v1109, %v1105
        %v1378 = vpack.c.b16 %v1110, %v1106
        %v1379 = vpack.c.b16 %v1111, %v1107
        %v1380 = vpack.c.b16 %v1116, %v1112
        %v1381 = vpack.c.b16 %v1117, %v1113
        %v1382 = vpack.c.b16 %v1118, %v1114
        %v1383 = vpack.c.b16 %v1119, %v1115
        %v1384 = vpack.c.b16 %v1124, %v1120
        %v1385 = vpack.c.b16 %v1125, %v1121
        %v1386 = vpack.c.b16 %v1126, %v1122
        %v1387 = vpack.c.b16 %v1127, %v1123
        %v1388 = vpack.c.b16 %v1132, %v1128
        %v1389 = vpack.c.b16 %v1133, %v1129
        %v1390 = vpack.c.b16 %v1134, %v1130
        %v1391 = vpack.c.b16 %v1135, %v1131
        %v1392 = vpack.c.b16 %v1140, %v1136
        %v1393 = vpack.c.b16 %v1141, %v1137
        %v1394 = vpack.c.b16 %v1142, %v1138
        %v1395 = vpack.c.b16 %v1143, %v1139
        %v1396 = vpack.c.b16 %v1148, %v1144
        %v1397 = vpack.c.b16 %v1149, %v1145
        %v1398 = vpack.c.b16 %v1150, %v1146
        %v1399 = vpack.c.b16 %v1151, %v1147
        %v1400 = vpack.c.b16 %v1156, %v1152
        %v1401 = vpack.c.b16 %v1157, %v1153
        %v1402 = vpack.c.b16 %v1158, %v1154
        %v1403 = vpack.c.b16 %v1159, %v1155
        %v1404 = vpack.c.b16 %v1164, %v1160
        %v1405 = vpack.c.b16 %v1165, %v1161
        %v1406 = vpack.c.b16 %v1166, %v1162
        %v1407 = vpack.c.b16 %v1167, %v1163
        %v1408 = vpack.c.b16 %v1172, %v1168
        %v1409 = vpack.c.b16 %v1173, %v1169
        %v1410 = vpack.c.b16 %v1174, %v1170
        %v1411 = vpack.c.b16 %v1175, %v1171
        %v1412 = vpack.c.b16 %v1180, %v1176
        %v1413 = vpack.c.b16 %v1181, %v1177
        %v1414 = vpack.c.b16 %v1182, %v1178
        %v1415 = vpack.c.b16 %v1183, %v1179
        %v1416 = vpack.c.b16 %v1188, %v1184
        %v1417 = vpack.c.b16 %v1189, %v1185
        %v1418 = vpack.c.b16 %v1190, %v1186
        %v1419 = vpack.c.b16 %v1191, %v1187
        %v1420 = vpack.c.b16 %v1196, %v1192
        %v1421 = vpack.c.b16 %v1197, %v1193
        %v1422 = vpack.c.b16 %v1198, %v1194
        %v1423 = vpack.c.b16 %v1199, %v1195
        %v1424 = vpack.c.b16 %v1204, %v1200
        %v1425 = vpack.c.b16 %v1205, %v1201
        %v1426 = vpack.c.b16 %v1206, %v1202
        %v1427 = vpack.c.b16 %v1207, %v1203
        %v1428 = vpack.c.b16 %v1212, %v1208
        %v1429 = vpack.c.b16 %v1213, %v1209
        %v1430 = vpack.c.b16 %v1214, %v1210
        %v1431 = vpack.c.b16 %v1215, %v1211
        %v1432 = vpack.c.b16 %v1220, %v1216
        %v1433 = vpack.c.b16 %v1221, %v1217
        %v1434 = vpack.c.b16 %v1222, %v1218
        %v1435 = vpack.c.b16 %v1223, %v1219
        %v1436 = vpack.c.b16 %v1228, %v1224
        %v1437 = vpack.c.b16 %v1229, %v1225
        %v1438 = vpack.c.b16 %v1230, %v1226
        %v1439 = vpack.c.b16 %v1231, %v1227
        %v1440 = vpack.c.b16 %v1236, %v1232
        %v1441 = vpack.c.b16 %v1237, %v1233
        %v1442 = vpack.c.b16 %v1238, %v1234
        %v1443 = vpack.c.b16 %v1239, %v1235
        %v1444 = vpack.c.b16 %v1244, %v1240
        %v1445 = vpack.c.b16 %v1245, %v1241
        %v1446 = vpack.c.b16 %v1246, %v1242
        %v1447 = vpack.c.b16 %v1247, %v1243
        %v1448 = vpack.c.b16 %v1252, %v1248
        %v1449 = vpack.c.b16 %v1253, %v1249
        %v1450 = vpack.c.b16 %v1254, %v1250
        %v1451 = vpack.c.b16 %v1255, %v1251
        %vm1648 = vcmask 130048
        %v1650 = vsel %vm1648, %v471, 0
        %1652 = vmatprep.subr.bf16.mxu0 %v1285
        %1653 = vmatpush1.bf16.msra.mxu0 %v1284
        %1654 = vmatprep.subr.bf16.mxu0 %v1281
        %1655 = vmatpush1.bf16.msra.mxu0 %v1280
        %1656 = vmatprep.subr.bf16.mxu0 %v1277
        %1657 = vmatpush1.bf16.msra.mxu0 %v1276
        %1658 = vmatprep.subr.bf16.mxu0 %v1273
        %1659 = vmatpush1.bf16.msra.mxu0 %v1272
        %1660 = vmatprep.subr.bf16.mxu0 %v1269
        %1661 = vmatpush1.bf16.msra.mxu0 %v1268
        %1662 = vmatprep.subr.bf16.mxu0 %v1265
        %1663 = vmatpush1.bf16.msra.mxu0 %v1264
        %1664 = vmatprep.subr.bf16.mxu0 %v1261
        %1665 = vmatpush1.bf16.msra.mxu0 %v1260
        %1666 = vmatprep.subr.bf16.mxu0 %v1257
        %1667 = vmatpush1.bf16.msra.mxu0 %v1256
        %1668 = vmatprep.subr.bf16.mxu0 %v1317
        %1669 = vmatpush2.bf16.msra.mxu0 %v1316
        %1670 = vmatprep.subr.bf16.mxu0 %v1313
        %1671 = vmatpush2.bf16.msra.mxu0 %v1312
        %1672 = vmatprep.subr.bf16.mxu0 %v1309
        %1673 = vmatpush2.bf16.msra.mxu0 %v1308
        %1674 = vmatprep.subr.bf16.mxu0 %v1305
        %1675 = vmatpush2.bf16.msra.mxu0 %v1304
        %1676 = vmatprep.subr.bf16.mxu0 %v1301
        %1677 = vmatpush2.bf16.msra.mxu0 %v1300
        %1678 = vmatprep.subr.bf16.mxu0 %v1297
        %1679 = vmatpush2.bf16.msra.mxu0 %v1296
        %1680 = vmatprep.subr.bf16.mxu0 %v1293
        %1681 = vmatpush2.bf16.msra.mxu0 %v1292
        %1682 = vmatprep.subr.bf16.mxu0 %v1289
        %1683 = vmatpush2.bf16.msra.mxu0 %v1288
        %1684 = vmatprep.mubr.bf16.mxu0 %v466
        %1685 = vmatmul.mubr.bf16.gmra.mxu0 %v465
        %v1686 = vpop.f32.mrf.mxu0
        %v1687 = vadd.f32 0.0, %v1686
        %v1688 = vpop.f32.mrf.mxu0
        %v1689 = vadd.f32 0.0, %v1688
        %v1690 = vpop.f32.mrf.mxu0
        %v1691 = vpop.f32.mrf.mxu0
        %1692 = vdwg.mxu0
        %1693 = vmatprep.subr.bf16.mxu0 %v1349
        %1694 = vmatpush1.bf16.msra.mxu0 %v1348
        %1695 = vmatprep.subr.bf16.mxu0 %v1345
        %1696 = vmatpush1.bf16.msra.mxu0 %v1344
        %1697 = vmatprep.subr.bf16.mxu0 %v1341
        %1698 = vmatpush1.bf16.msra.mxu0 %v1340
        %1699 = vmatprep.subr.bf16.mxu0 %v1337
        %1700 = vmatpush1.bf16.msra.mxu0 %v1336
        %1701 = vmatprep.subr.bf16.mxu0 %v1333
        %1702 = vmatpush1.bf16.msra.mxu0 %v1332
        %1703 = vmatprep.subr.bf16.mxu0 %v1329
        %1704 = vmatpush1.bf16.msra.mxu0 %v1328
        %1705 = vmatprep.subr.bf16.mxu0 %v1325
        %1706 = vmatpush1.bf16.msra.mxu0 %v1324
        %1707 = vmatprep.subr.bf16.mxu0 %v1321
        %1708 = vmatpush1.bf16.msra.mxu0 %v1320
        %1709 = vmatprep.subr.bf16.mxu0 %v1381
        %1710 = vmatpush2.bf16.msra.mxu0 %v1380
        %1711 = vmatprep.subr.bf16.mxu0 %v1377
        %1712 = vmatpush2.bf16.msra.mxu0 %v1376
        %1713 = vmatprep.subr.bf16.mxu0 %v1373
        %1714 = vmatpush2.bf16.msra.mxu0 %v1372
        %1715 = vmatprep.subr.bf16.mxu0 %v1369
        %1716 = vmatpush2.bf16.msra.mxu0 %v1368
        %1717 = vmatprep.subr.bf16.mxu0 %v1365
        %1718 = vmatpush2.bf16.msra.mxu0 %v1364
        %1719 = vmatprep.subr.bf16.mxu0 %v1361
        %1720 = vmatpush2.bf16.msra.mxu0 %v1360
        %1721 = vmatprep.subr.bf16.mxu0 %v1357
        %1722 = vmatpush2.bf16.msra.mxu0 %v1356
        %1723 = vmatprep.subr.bf16.mxu0 %v1353
        %1724 = vmatpush2.bf16.msra.mxu0 %v1352
        %1725 = vmatprep.mubr.bf16.mxu0 %v468
        %1726 = vmatmul.mubr.bf16.gmra.mxu0 %v467
        %v1727 = vpop.f32.mrf.mxu0
        %v1728 = vadd.f32 %v1687, %v1727
        %v1729 = vpop.f32.mrf.mxu0
        %v1730 = vadd.f32 %v1689, %v1729
        %v1731 = vpop.f32.mrf.mxu0
        %v1732 = vpop.f32.mrf.mxu0
        %1733 = vdwg.mxu0
        %1734 = vmatprep.subr.bf16.mxu0 %v1413
        %1735 = vmatpush1.bf16.msra.mxu0 %v1412
        %1736 = vmatprep.subr.bf16.mxu0 %v1409
        %1737 = vmatpush1.bf16.msra.mxu0 %v1408
        %1738 = vmatprep.subr.bf16.mxu0 %v1405
        %1739 = vmatpush1.bf16.msra.mxu0 %v1404
        %1740 = vmatprep.subr.bf16.mxu0 %v1401
        %1741 = vmatpush1.bf16.msra.mxu0 %v1400
        %1742 = vmatprep.subr.bf16.mxu0 %v1397
        %1743 = vmatpush1.bf16.msra.mxu0 %v1396
        %1744 = vmatprep.subr.bf16.mxu0 %v1393
        %1745 = vmatpush1.bf16.msra.mxu0 %v1392
        %1746 = vmatprep.subr.bf16.mxu0 %v1389
        %1747 = vmatpush1.bf16.msra.mxu0 %v1388
        %1748 = vmatprep.subr.bf16.mxu0 %v1385
        %1749 = vmatpush1.bf16.msra.mxu0 %v1384
        %1750 = vmatprep.subr.bf16.mxu0 %v1445
        %1751 = vmatpush2.bf16.msra.mxu0 %v1444
        %1752 = vmatprep.subr.bf16.mxu0 %v1441
        %1753 = vmatpush2.bf16.msra.mxu0 %v1440
        %1754 = vmatprep.subr.bf16.mxu0 %v1437
        %1755 = vmatpush2.bf16.msra.mxu0 %v1436
        %1756 = vmatprep.subr.bf16.mxu0 %v1433
        %1757 = vmatpush2.bf16.msra.mxu0 %v1432
        %1758 = vmatprep.subr.bf16.mxu0 %v1429
        %1759 = vmatpush2.bf16.msra.mxu0 %v1428
        %1760 = vmatprep.subr.bf16.mxu0 %v1425
        %1761 = vmatpush2.bf16.msra.mxu0 %v1424
        %1762 = vmatprep.subr.bf16.mxu0 %v1421
        %1763 = vmatpush2.bf16.msra.mxu0 %v1420
        %1764 = vmatprep.subr.bf16.mxu0 %v1417
        %1765 = vmatpush2.bf16.msra.mxu0 %v1416
        %1766 = vmatprep.mubr.bf16.mxu0 %v470
        %1767 = vmatmul.mubr.bf16.gmra.mxu0 %v469
        %v1768 = vpop.f32.mrf.mxu0
        %v1769 = vadd.f32 %v1728, %v1768
        %v1770 = vpop.f32.mrf.mxu0
        %v1771 = vadd.f32 %v1730, %v1770
        %v1772 = vpop.f32.mrf.mxu0
        %v1773 = vpop.f32.mrf.mxu0
        %1774 = vdwg.mxu0
        %1775 = vmatprep.subr.bf16.mxu0 0
        %1776 = vmatpush1.bf16.msra.mxu0 0
        %1777 = vmatprep.subr.bf16.mxu0 0
        %1778 = vmatpush1.bf16.msra.mxu0 0
        %1779 = vmatprep.subr.bf16.mxu0 0
        %1780 = vmatpush1.bf16.msra.mxu0 0
        %1781 = vmatprep.subr.bf16.mxu0 0
        %1782 = vmatpush1.bf16.msra.mxu0 0
        %1783 = vmatprep.subr.bf16.mxu0 0
        %1784 = vmatpush1.bf16.msra.mxu0 0
        %1785 = vmatprep.subr.bf16.mxu0 0
        %1786 = vmatpush1.bf16.msra.mxu0 0
        %1787 = vmatprep.subr.bf16.mxu0 0
        %1788 = vmatpush1.bf16.msra.mxu0 0
        %1789 = vmatprep.subr.bf16.mxu0 %v1449
        %1790 = vmatpush1.bf16.msra.mxu0 %v1448
        %1791 = vmatprep.subr.bf16.mxu0 0
        %1792 = vmatpush2.bf16.msra.mxu0 0
        %1793 = vmatprep.subr.bf16.mxu0 0
        %1794 = vmatpush2.bf16.msra.mxu0 0
        %1795 = vmatprep.subr.bf16.mxu0 0
        %1796 = vmatpush2.bf16.msra.mxu0 0
        %1797 = vmatprep.subr.bf16.mxu0 0
        %1798 = vmatpush2.bf16.msra.mxu0 0
        %1799 = vmatprep.subr.bf16.mxu0 0
        %1800 = vmatpush2.bf16.msra.mxu0 0
        %1801 = vmatprep.subr.bf16.mxu0 0
        %1802 = vmatpush2.bf16.msra.mxu0 0
        %1803 = vmatprep.subr.bf16.mxu0 0
        %1804 = vmatpush2.bf16.msra.mxu0 0
        %1805 = vmatprep.subr.bf16.mxu0 0
        %1806 = vmatpush2.bf16.msra.mxu0 0
        %1807 = vmatprep.mubr.bf16.mxu0 0
        %1808 = vmatmul.mubr.bf16.gmra.mxu0 %v1650
        %v1809 = vpop.f32.mrf.mxu0
        %v1810 = vadd.f32 %v1769, %v1809
        %v1811 = vpop.f32.mrf.mxu0
        %v1812 = vadd.f32 %v1771, %v1811
        %v1813 = vpop.f32.mrf.mxu0
        %v1814 = vpop.f32.mrf.mxu0
        %1815 = vdwg.mxu0
        %1816 = vmatprep.subr.bf16.mxu0 %v1287
        %1817 = vmatpush1.bf16.msra.mxu0 %v1286
        %1818 = vmatprep.subr.bf16.mxu0 %v1283
        %1819 = vmatpush1.bf16.msra.mxu0 %v1282
        %1820 = vmatprep.subr.bf16.mxu0 %v1279
        %1821 = vmatpush1.bf16.msra.mxu0 %v1278
        %1822 = vmatprep.subr.bf16.mxu0 %v1275
        %1823 = vmatpush1.bf16.msra.mxu0 %v1274
        %1824 = vmatprep.subr.bf16.mxu0 %v1271
        %1825 = vmatpush1.bf16.msra.mxu0 %v1270
        %1826 = vmatprep.subr.bf16.mxu0 %v1267
        %1827 = vmatpush1.bf16.msra.mxu0 %v1266
        %1828 = vmatprep.subr.bf16.mxu0 %v1263
        %1829 = vmatpush1.bf16.msra.mxu0 %v1262
        %1830 = vmatprep.subr.bf16.mxu0 %v1259
        %1831 = vmatpush1.bf16.msra.mxu0 %v1258
        %1832 = vmatprep.subr.bf16.mxu0 %v1319
        %1833 = vmatpush2.bf16.msra.mxu0 %v1318
        %1834 = vmatprep.subr.bf16.mxu0 %v1315
        %1835 = vmatpush2.bf16.msra.mxu0 %v1314
        %1836 = vmatprep.subr.bf16.mxu0 %v1311
        %1837 = vmatpush2.bf16.msra.mxu0 %v1310
        %1838 = vmatprep.subr.bf16.mxu0 %v1307
        %1839 = vmatpush2.bf16.msra.mxu0 %v1306
        %1840 = vmatprep.subr.bf16.mxu0 %v1303
        %1841 = vmatpush2.bf16.msra.mxu0 %v1302
        %1842 = vmatprep.subr.bf16.mxu0 %v1299
        %1843 = vmatpush2.bf16.msra.mxu0 %v1298
        %1844 = vmatprep.subr.bf16.mxu0 %v1295
        %1845 = vmatpush2.bf16.msra.mxu0 %v1294
        %1846 = vmatprep.subr.bf16.mxu0 %v1291
        %1847 = vmatpush2.bf16.msra.mxu0 %v1290
        %1848 = vmatprep.mubr.bf16.mxu0 %v466
        %1849 = vmatmul.mubr.bf16.gmra.mxu0 %v465
        %v1850 = vpop.f32.mrf.mxu0
        %v1851 = vadd.f32 0.0, %v1850
        %v1852 = vpop.f32.mrf.mxu0
        %v1853 = vadd.f32 0.0, %v1852
        %v1854 = vpop.f32.mrf.mxu0
        %v1855 = vpop.f32.mrf.mxu0
        %1856 = vdwg.mxu0
        %1857 = vmatprep.subr.bf16.mxu0 %v1351
        %1858 = vmatpush1.bf16.msra.mxu0 %v1350
        %1859 = vmatprep.subr.bf16.mxu0 %v1347
        %1860 = vmatpush1.bf16.msra.mxu0 %v1346
        %1861 = vmatprep.subr.bf16.mxu0 %v1343
        %1862 = vmatpush1.bf16.msra.mxu0 %v1342
        %1863 = vmatprep.subr.bf16.mxu0 %v1339
        %1864 = vmatpush1.bf16.msra.mxu0 %v1338
        %1865 = vmatprep.subr.bf16.mxu0 %v1335
        %1866 = vmatpush1.bf16.msra.mxu0 %v1334
        %1867 = vmatprep.subr.bf16.mxu0 %v1331
        %1868 = vmatpush1.bf16.msra.mxu0 %v1330
        %1869 = vmatprep.subr.bf16.mxu0 %v1327
        %1870 = vmatpush1.bf16.msra.mxu0 %v1326
        %1871 = vmatprep.subr.bf16.mxu0 %v1323
        %1872 = vmatpush1.bf16.msra.mxu0 %v1322
        %1873 = vmatprep.subr.bf16.mxu0 %v1383
        %1874 = vmatpush2.bf16.msra.mxu0 %v1382
        %1875 = vmatprep.subr.bf16.mxu0 %v1379
        %1876 = vmatpush2.bf16.msra.mxu0 %v1378
        %1877 = vmatprep.subr.bf16.mxu0 %v1375
        %1878 = vmatpush2.bf16.msra.mxu0 %v1374
        %1879 = vmatprep.subr.bf16.mxu0 %v1371
        %1880 = vmatpush2.bf16.msra.mxu0 %v1370
        %1881 = vmatprep.subr.bf16.mxu0 %v1367
        %1882 = vmatpush2.bf16.msra.mxu0 %v1366
        %1883 = vmatprep.subr.bf16.mxu0 %v1363
        %1884 = vmatpush2.bf16.msra.mxu0 %v1362
        %1885 = vmatprep.subr.bf16.mxu0 %v1359
        %1886 = vmatpush2.bf16.msra.mxu0 %v1358
        %1887 = vmatprep.subr.bf16.mxu0 %v1355
        %1888 = vmatpush2.bf16.msra.mxu0 %v1354
        %1889 = vmatprep.mubr.bf16.mxu0 %v468
        %1890 = vmatmul.mubr.bf16.gmra.mxu0 %v467
        %v1891 = vpop.f32.mrf.mxu0
        %v1892 = vadd.f32 %v1851, %v1891
        %v1893 = vpop.f32.mrf.mxu0
        %v1894 = vadd.f32 %v1853, %v1893
        %v1895 = vpop.f32.mrf.mxu0
        %v1896 = vpop.f32.mrf.mxu0
        %1897 = vdwg.mxu0
        %1898 = vmatprep.subr.bf16.mxu0 %v1415
        %1899 = vmatpush1.bf16.msra.mxu0 %v1414
        %1900 = vmatprep.subr.bf16.mxu0 %v1411
        %1901 = vmatpush1.bf16.msra.mxu0 %v1410
        %1902 = vmatprep.subr.bf16.mxu0 %v1407
        %1903 = vmatpush1.bf16.msra.mxu0 %v1406
        %1904 = vmatprep.subr.bf16.mxu0 %v1403
        %1905 = vmatpush1.bf16.msra.mxu0 %v1402
        %1906 = vmatprep.subr.bf16.mxu0 %v1399
        %1907 = vmatpush1.bf16.msra.mxu0 %v1398
        %1908 = vmatprep.subr.bf16.mxu0 %v1395
        %1909 = vmatpush1.bf16.msra.mxu0 %v1394
        %1910 = vmatprep.subr.bf16.mxu0 %v1391
        %1911 = vmatpush1.bf16.msra.mxu0 %v1390
        %1912 = vmatprep.subr.bf16.mxu0 %v1387
        %1913 = vmatpush1.bf16.msra.mxu0 %v1386
        %1914 = vmatprep.subr.bf16.mxu0 %v1447
        %1915 = vmatpush2.bf16.msra.mxu0 %v1446
        %1916 = vmatprep.subr.bf16.mxu0 %v1443
        %1917 = vmatpush2.bf16.msra.mxu0 %v1442
        %1918 = vmatprep.subr.bf16.mxu0 %v1439
        %1919 = vmatpush2.bf16.msra.mxu0 %v1438
        %1920 = vmatprep.subr.bf16.mxu0 %v1435
        %1921 = vmatpush2.bf16.msra.mxu0 %v1434
        %1922 = vmatprep.subr.bf16.mxu0 %v1431
        %1923 = vmatpush2.bf16.msra.mxu0 %v1430
        %1924 = vmatprep.subr.bf16.mxu0 %v1427
        %1925 = vmatpush2.bf16.msra.mxu0 %v1426
        %1926 = vmatprep.subr.bf16.mxu0 %v1423
        %1927 = vmatpush2.bf16.msra.mxu0 %v1422
        %1928 = vmatprep.subr.bf16.mxu0 %v1419
        %1929 = vmatpush2.bf16.msra.mxu0 %v1418
        %1930 = vmatprep.mubr.bf16.mxu0 %v470
        %1931 = vmatmul.mubr.bf16.gmra.mxu0 %v469
        %v1932 = vpop.f32.mrf.mxu0
        %v1933 = vadd.f32 %v1892, %v1932
        %v1934 = vpop.f32.mrf.mxu0
        %v1935 = vadd.f32 %v1894, %v1934
        %v1936 = vpop.f32.mrf.mxu0
        %v1937 = vpop.f32.mrf.mxu0
        %1938 = vdwg.mxu0
        %1939 = vmatprep.subr.bf16.mxu0 0
        %1940 = vmatpush1.bf16.msra.mxu0 0
        %1941 = vmatprep.subr.bf16.mxu0 0
        %1942 = vmatpush1.bf16.msra.mxu0 0
        %1943 = vmatprep.subr.bf16.mxu0 0
        %1944 = vmatpush1.bf16.msra.mxu0 0
        %1945 = vmatprep.subr.bf16.mxu0 0
        %1946 = vmatpush1.bf16.msra.mxu0 0
        %1947 = vmatprep.subr.bf16.mxu0 0
        %1948 = vmatpush1.bf16.msra.mxu0 0
        %1949 = vmatprep.subr.bf16.mxu0 0
        %1950 = vmatpush1.bf16.msra.mxu0 0
        %1951 = vmatprep.subr.bf16.mxu0 0
        %1952 = vmatpush1.bf16.msra.mxu0 0
        %1953 = vmatprep.subr.bf16.mxu0 %v1451
        %1954 = vmatpush1.bf16.msra.mxu0 %v1450
        %1955 = vmatprep.subr.bf16.mxu0 0
        %1956 = vmatpush2.bf16.msra.mxu0 0
        %1957 = vmatprep.subr.bf16.mxu0 0
        %1958 = vmatpush2.bf16.msra.mxu0 0
        %1959 = vmatprep.subr.bf16.mxu0 0
        %1960 = vmatpush2.bf16.msra.mxu0 0
        %1961 = vmatprep.subr.bf16.mxu0 0
        %1962 = vmatpush2.bf16.msra.mxu0 0
        %1963 = vmatprep.subr.bf16.mxu0 0
        %1964 = vmatpush2.bf16.msra.mxu0 0
        %1965 = vmatprep.subr.bf16.mxu0 0
        %1966 = vmatpush2.bf16.msra.mxu0 0
        %1967 = vmatprep.subr.bf16.mxu0 0
        %1968 = vmatpush2.bf16.msra.mxu0 0
        %1969 = vmatprep.subr.bf16.mxu0 0
        %1970 = vmatpush2.bf16.msra.mxu0 0
        %1971 = vmatprep.mubr.bf16.mxu0 0
        %1972 = vmatmul.mubr.bf16.gmra.mxu0 %v1650
        %v1973 = vpop.f32.mrf.mxu0
        %v1974 = vadd.f32 %v1933, %v1973
        %v1975 = vpop.f32.mrf.mxu0
        %v1976 = vadd.f32 %v1935, %v1975
        %v1977 = vpop.f32.mrf.mxu0
        %v1978 = vpop.f32.mrf.mxu0
        %1979 = vdwg.mxu0
        %vm1980 = vcmp.ge.f32.partialorder %v1810, 0.0
        %vm1981 = vcmp.ge.f32.partialorder %v1812, 0.0
        %vm1982 = vcmp.ge.f32.partialorder %v1974, 0.0
        %vm1983 = vcmp.ge.f32.partialorder %v1976, 0.0
        %v1984 = vmul.f32 %v1810, 0.001
        %v1985 = vmul.f32 %v1812, 0.001
        %v1986 = vmul.f32 %v1974, 0.001
        %v1987 = vmul.f32 %v1976, 0.001
        %v1988 = vsel %vm1980, %v1810, %v1984
        %v1989 = vsel %vm1981, %v1812, %v1985
        %v1990 = vsel %vm1982, %v1974, %v1986
        %v1991 = vsel %vm1983, %v1976, %v1987
        %v1992 = vpack.c.bf16 %v1988, %v1988
        %v1993 = vpack.c.bf16 %v1989, %v1989
        %v1994 = vpack.c.bf16 %v1990, %v1990
        %v1995 = vpack.c.bf16 %v1991, %v1991
        %v1996 = vld [vmem:[%s2] sm:$0xff]
        %v1997 = vld [vmem:[%s2 + $0x8] sm:$0xff]
        %v1998 = vld [vmem:[%s2 + $0x10] sm:$0xff]
        %v1999 = vld [vmem:[%s2 + $0x18] sm:$0xff]
        %v2000 = vld [vmem:[%s2 + $0x20] sm:$0xff]
        %v2001 = vld [vmem:[%s2 + $0x28] sm:$0xff]
        %v2002 = vld [vmem:[%s2 + $0x30] sm:$0xff]
        %v2003 = vld [vmem:[%s2 + $0x38] sm:$0xff]
        %v2004 = vld [vmem:[%s2 + $0x40] sm:$0xff]
        %v2005 = vld [vmem:[%s2 + $0x48] sm:$0xff]
        %v2006 = vld [vmem:[%s2 + $0x50] sm:$0xff]
        %v2007 = vld [vmem:[%s2 + $0x58] sm:$0xff]
        %v2008 = vld [vmem:[%s2 + $0x60] sm:$0xff]
        %v2009 = vld [vmem:[%s2 + $0x68] sm:$0xff]
        %v2010 = vld [vmem:[%s2 + $0x70] sm:$0xff]
        %v2011 = vld [vmem:[%s2 + $0x78] sm:$0xff]
        %v2012 = vld [vmem:[%s2 + $0x80] sm:$0xff]
        %v2013 = vld [vmem:[%s2 + $0x88] sm:$0xff]
        %v2014 = vld [vmem:[%s2 + $0x90] sm:$0xff]
        %v2015 = vld [vmem:[%s2 + $0x98] sm:$0xff]
        %v2016 = vld [vmem:[%s2 + $0xa0] sm:$0xff]
        %v2017 = vld [vmem:[%s2 + $0xa8] sm:$0xff]
        %v2018 = vld [vmem:[%s2 + $0xb0] sm:$0xff]
        %v2019 = vld [vmem:[%s2 + $0xb8] sm:$0xff]
        %v2020 = vld [vmem:[%s2 + $0xc0] sm:$0xff]
        %v2021 = vld [vmem:[%s2 + $0xc8] sm:$0xff]
        %v2022 = vld [vmem:[%s2 + $0xd0] sm:$0xff]
        %v2023 = vld [vmem:[%s2 + $0xd8] sm:$0xff]
        %v2024 = vld [vmem:[%s2 + $0xe0] sm:$0xff]
        %v2025 = vld [vmem:[%s2 + $0xe8] sm:$0xff]
        %v2026 = vld [vmem:[%s2 + $0xf0] sm:$0xff]
        %v2027 = vld [vmem:[%s2 + $0xf8] sm:$0xff]
        %v2028 = vld [vmem:[%s2 + $0x100] sm:$0xff]
        %v2029 = vld [vmem:[%s2 + $0x108] sm:$0xff]
        %v2030 = vld [vmem:[%s2 + $0x110] sm:$0xff]
        %v2031 = vld [vmem:[%s2 + $0x118] sm:$0xff]
        %v2032 = vld [vmem:[%s2 + $0x120] sm:$0xff]
        %v2033 = vld [vmem:[%s2 + $0x128] sm:$0xff]
        %v2034 = vld [vmem:[%s2 + $0x130] sm:$0xff]
        %v2035 = vld [vmem:[%s2 + $0x138] sm:$0xff]
        %v2036 = vld [vmem:[%s2 + $0x140] sm:$0xff]
        %v2037 = vld [vmem:[%s2 + $0x148] sm:$0xff]
        %v2038 = vld [vmem:[%s2 + $0x150] sm:$0xff]
        %v2039 = vld [vmem:[%s2 + $0x158] sm:$0xff]
        %v2040 = vld [vmem:[%s2 + $0x160] sm:$0xff]
        %v2041 = vld [vmem:[%s2 + $0x168] sm:$0xff]
        %v2042 = vld [vmem:[%s2 + $0x170] sm:$0xff]
        %v2043 = vld [vmem:[%s2 + $0x178] sm:$0xff]
        %v2044 = vld [vmem:[%s2 + $0x180] sm:$0xff]
        %v2094 = vunpack.c.l.b16 %v1996
        %v2095 = vunpack.c.h.b16 %v1996
        %v2096 = vunpack.c.l.b16 %v1997
        %v2097 = vunpack.c.h.b16 %v1997
        %v2098 = vunpack.c.l.b16 %v1998
        %v2099 = vunpack.c.h.b16 %v1998
        %v2100 = vunpack.c.l.b16 %v1999
        %v2101 = vunpack.c.h.b16 %v1999
        %v2102 = vunpack.c.l.b16 %v2000
        %v2103 = vunpack.c.h.b16 %v2000
        %v2104 = vunpack.c.l.b16 %v2001
        %v2105 = vunpack.c.h.b16 %v2001
        %v2106 = vunpack.c.l.b16 %v2002
        %v2107 = vunpack.c.h.b16 %v2002
        %v2108 = vunpack.c.l.b16 %v2003
        %v2109 = vunpack.c.h.b16 %v2003
        %v2110 = vunpack.c.l.b16 %v2004
        %v2111 = vunpack.c.h.b16 %v2004
        %v2112 = vunpack.c.l.b16 %v2005
        %v2113 = vunpack.c.h.b16 %v2005
        %v2114 = vunpack.c.l.b16 %v2006
        %v2115 = vunpack.c.h.b16 %v2006
        %v2116 = vunpack.c.l.b16 %v2007
        %v2117 = vunpack.c.h.b16 %v2007
        %v2118 = vunpack.c.l.b16 %v2008
        %v2119 = vunpack.c.h.b16 %v2008
        %v2120 = vunpack.c.l.b16 %v2009
        %v2121 = vunpack.c.h.b16 %v2009
        %v2122 = vunpack.c.l.b16 %v2010
        %v2123 = vunpack.c.h.b16 %v2010
        %v2124 = vunpack.c.l.b16 %v2011
        %v2125 = vunpack.c.h.b16 %v2011
        %v2126 = vunpack.c.l.b16 %v2012
        %v2127 = vunpack.c.h.b16 %v2012
        %v2128 = vunpack.c.l.b16 %v2013
        %v2129 = vunpack.c.h.b16 %v2013
        %v2130 = vunpack.c.l.b16 %v2014
        %v2131 = vunpack.c.h.b16 %v2014
        %v2132 = vunpack.c.l.b16 %v2015
        %v2133 = vunpack.c.h.b16 %v2015
        %v2134 = vunpack.c.l.b16 %v2016
        %v2135 = vunpack.c.h.b16 %v2016
        %v2136 = vunpack.c.l.b16 %v2017
        %v2137 = vunpack.c.h.b16 %v2017
        %v2138 = vunpack.c.l.b16 %v2018
        %v2139 = vunpack.c.h.b16 %v2018
        %v2140 = vunpack.c.l.b16 %v2019
        %v2141 = vunpack.c.h.b16 %v2019
        %v2142 = vunpack.c.l.b16 %v2020
        %v2143 = vunpack.c.h.b16 %v2020
        %v2144 = vunpack.c.l.b16 %v2021
        %v2145 = vunpack.c.h.b16 %v2021
        %v2146 = vunpack.c.l.b16 %v2022
        %v2147 = vunpack.c.h.b16 %v2022
        %v2148 = vunpack.c.l.b16 %v2023
        %v2149 = vunpack.c.h.b16 %v2023
        %v2150 = vunpack.c.l.b16 %v2024
        %v2151 = vunpack.c.h.b16 %v2024
        %v2152 = vunpack.c.l.b16 %v2025
        %v2153 = vunpack.c.h.b16 %v2025
        %v2154 = vunpack.c.l.b16 %v2026
        %v2155 = vunpack.c.h.b16 %v2026
        %v2156 = vunpack.c.l.b16 %v2027
        %v2157 = vunpack.c.h.b16 %v2027
        %v2158 = vunpack.c.l.b16 %v2028
        %v2159 = vunpack.c.h.b16 %v2028
        %v2160 = vunpack.c.l.b16 %v2029
        %v2161 = vunpack.c.h.b16 %v2029
        %v2162 = vunpack.c.l.b16 %v2030
        %v2163 = vunpack.c.h.b16 %v2030
        %v2164 = vunpack.c.l.b16 %v2031
        %v2165 = vunpack.c.h.b16 %v2031
        %v2166 = vunpack.c.l.b16 %v2032
        %v2167 = vunpack.c.h.b16 %v2032
        %v2168 = vunpack.c.l.b16 %v2033
        %v2169 = vunpack.c.h.b16 %v2033
        %v2170 = vunpack.c.l.b16 %v2034
        %v2171 = vunpack.c.h.b16 %v2034
        %v2172 = vunpack.c.l.b16 %v2035
        %v2173 = vunpack.c.h.b16 %v2035
        %v2174 = vunpack.c.l.b16 %v2036
        %v2175 = vunpack.c.h.b16 %v2036
        %v2176 = vunpack.c.l.b16 %v2037
        %v2177 = vunpack.c.h.b16 %v2037
        %v2178 = vunpack.c.l.b16 %v2038
        %v2179 = vunpack.c.h.b16 %v2038
        %v2180 = vunpack.c.l.b16 %v2039
        %v2181 = vunpack.c.h.b16 %v2039
        %v2182 = vunpack.c.l.b16 %v2040
        %v2183 = vunpack.c.h.b16 %v2040
        %v2184 = vunpack.c.l.b16 %v2041
        %v2185 = vunpack.c.h.b16 %v2041
        %v2186 = vunpack.c.l.b16 %v2042
        %v2187 = vunpack.c.h.b16 %v2042
        %v2188 = vunpack.c.l.b16 %v2043
        %v2189 = vunpack.c.h.b16 %v2043
        %v2190 = vunpack.c.l.b16 %v2044
        %v2191 = vunpack.c.h.b16 %v2044
        %v2192 = vpack.c.b16 %v2096, %v2094
        %v2193 = vpack.c.b16 %v2097, %v2095
        %v2194 = vpack.c.b16 %v2100, %v2098
        %v2195 = vpack.c.b16 %v2101, %v2099
        %v2196 = vpack.c.b16 %v2104, %v2102
        %v2197 = vpack.c.b16 %v2105, %v2103
        %v2198 = vpack.c.b16 %v2108, %v2106
        %v2199 = vpack.c.b16 %v2109, %v2107
        %v2200 = vpack.c.b16 %v2112, %v2110
        %v2201 = vpack.c.b16 %v2113, %v2111
        %v2202 = vpack.c.b16 %v2116, %v2114
        %v2203 = vpack.c.b16 %v2117, %v2115
        %v2204 = vpack.c.b16 %v2120, %v2118
        %v2205 = vpack.c.b16 %v2121, %v2119
        %v2206 = vpack.c.b16 %v2124, %v2122
        %v2207 = vpack.c.b16 %v2125, %v2123
        %v2208 = vpack.c.b16 %v2128, %v2126
        %v2209 = vpack.c.b16 %v2129, %v2127
        %v2210 = vpack.c.b16 %v2132, %v2130
        %v2211 = vpack.c.b16 %v2133, %v2131
        %v2212 = vpack.c.b16 %v2136, %v2134
        %v2213 = vpack.c.b16 %v2137, %v2135
        %v2214 = vpack.c.b16 %v2140, %v2138
        %v2215 = vpack.c.b16 %v2141, %v2139
        %v2216 = vpack.c.b16 %v2144, %v2142
        %v2217 = vpack.c.b16 %v2145, %v2143
        %v2218 = vpack.c.b16 %v2148, %v2146
        %v2219 = vpack.c.b16 %v2149, %v2147
        %v2220 = vpack.c.b16 %v2152, %v2150
        %v2221 = vpack.c.b16 %v2153, %v2151
        %v2222 = vpack.c.b16 %v2156, %v2154
        %v2223 = vpack.c.b16 %v2157, %v2155
        %v2224 = vpack.c.b16 %v2160, %v2158
        %v2225 = vpack.c.b16 %v2161, %v2159
        %v2226 = vpack.c.b16 %v2164, %v2162
        %v2227 = vpack.c.b16 %v2165, %v2163
        %v2228 = vpack.c.b16 %v2168, %v2166
        %v2229 = vpack.c.b16 %v2169, %v2167
        %v2230 = vpack.c.b16 %v2172, %v2170
        %v2231 = vpack.c.b16 %v2173, %v2171
        %v2232 = vpack.c.b16 %v2176, %v2174
        %v2233 = vpack.c.b16 %v2177, %v2175
        %v2234 = vpack.c.b16 %v2180, %v2178
        %v2235 = vpack.c.b16 %v2181, %v2179
        %v2236 = vpack.c.b16 %v2184, %v2182
        %v2237 = vpack.c.b16 %v2185, %v2183
        %v2238 = vpack.c.b16 %v2188, %v2186
        %v2239 = vpack.c.b16 %v2189, %v2187
        %v2240 = vpack.c.b16 %v2190, %v2190
        %v2241 = vpack.c.b16 %v2191, %v2191
        %vm2290 = vcmask 64512
        %v2292 = vsel %vm2290, %v1995, 0
        %vm2294 = vcmask 1043456
        %v2296 = vsel %vm2294, %v2240, 0
        %v2299 = vsel %vm2294, %v2241, 0
        %2301 = vmatprep.subr.bf16.mxu0 %v2207
        %2302 = vmatpush1.bf16.msra.mxu0 %v2206
        %2303 = vmatprep.subr.bf16.mxu0 %v2205
        %2304 = vmatpush1.bf16.msra.mxu0 %v2204
        %2305 = vmatprep.subr.bf16.mxu0 %v2203
        %2306 = vmatpush1.bf16.msra.mxu0 %v2202
        %2307 = vmatprep.subr.bf16.mxu0 %v2201
        %2308 = vmatpush1.bf16.msra.mxu0 %v2200
        %2309 = vmatprep.subr.bf16.mxu0 %v2199
        %2310 = vmatpush1.bf16.msra.mxu0 %v2198
        %2311 = vmatprep.subr.bf16.mxu0 %v2197
        %2312 = vmatpush1.bf16.msra.mxu0 %v2196
        %2313 = vmatprep.subr.bf16.mxu0 %v2195
        %2314 = vmatpush1.bf16.msra.mxu0 %v2194
        %2315 = vmatprep.subr.bf16.mxu0 %v2193
        %2316 = vmatpush1.bf16.msra.mxu0 %v2192
        %2317 = vmatprep.subr.bf16.mxu0 %v2223
        %2318 = vmatpush2.bf16.msra.mxu0 %v2222
        %2319 = vmatprep.subr.bf16.mxu0 %v2221
        %2320 = vmatpush2.bf16.msra.mxu0 %v2220
        %2321 = vmatprep.subr.bf16.mxu0 %v2219
        %2322 = vmatpush2.bf16.msra.mxu0 %v2218
        %2323 = vmatprep.subr.bf16.mxu0 %v2217
        %2324 = vmatpush2.bf16.msra.mxu0 %v2216
        %2325 = vmatprep.subr.bf16.mxu0 %v2215
        %2326 = vmatpush2.bf16.msra.mxu0 %v2214
        %2327 = vmatprep.subr.bf16.mxu0 %v2213
        %2328 = vmatpush2.bf16.msra.mxu0 %v2212
        %2329 = vmatprep.subr.bf16.mxu0 %v2211
        %2330 = vmatpush2.bf16.msra.mxu0 %v2210
        %2331 = vmatprep.subr.bf16.mxu0 %v2209
        %2332 = vmatpush2.bf16.msra.mxu0 %v2208
        %2333 = vmatprep.mubr.bf16.mxu0 %v1993
        %2334 = vmatmul.mubr.bf16.gmra.mxu0 %v1992
        %v2335 = vpop.f32.mrf.mxu0
        %v2336 = vadd.f32 0.0, %v2335
        %v2337 = vpop.f32.mrf.mxu0
        %v2338 = vadd.f32 0.0, %v2337
        %v2339 = vpop.f32.mrf.mxu0
        %v2340 = vpop.f32.mrf.mxu0
        %2341 = vdwg.mxu0
        %2342 = vmatprep.subr.bf16.mxu0 %v2239
        %2343 = vmatpush1.bf16.msra.mxu0 %v2238
        %2344 = vmatprep.subr.bf16.mxu0 %v2237
        %2345 = vmatpush1.bf16.msra.mxu0 %v2236
        %2346 = vmatprep.subr.bf16.mxu0 %v2235
        %2347 = vmatpush1.bf16.msra.mxu0 %v2234
        %2348 = vmatprep.subr.bf16.mxu0 %v2233
        %2349 = vmatpush1.bf16.msra.mxu0 %v2232
        %2350 = vmatprep.subr.bf16.mxu0 %v2231
        %2351 = vmatpush1.bf16.msra.mxu0 %v2230
        %2352 = vmatprep.subr.bf16.mxu0 %v2229
        %2353 = vmatpush1.bf16.msra.mxu0 %v2228
        %2354 = vmatprep.subr.bf16.mxu0 %v2227
        %2355 = vmatpush1.bf16.msra.mxu0 %v2226
        %2356 = vmatprep.subr.bf16.mxu0 %v2225
        %2357 = vmatpush1.bf16.msra.mxu0 %v2224
        %2358 = vmatprep.subr.bf16.mxu0 0
        %2359 = vmatpush2.bf16.msra.mxu0 0
        %2360 = vmatprep.subr.bf16.mxu0 0
        %2361 = vmatpush2.bf16.msra.mxu0 0
        %2362 = vmatprep.subr.bf16.mxu0 0
        %2363 = vmatpush2.bf16.msra.mxu0 0
        %2364 = vmatprep.subr.bf16.mxu0 0
        %2365 = vmatpush2.bf16.msra.mxu0 0
        %2366 = vmatprep.subr.bf16.mxu0 0
        %2367 = vmatpush2.bf16.msra.mxu0 0
        %2368 = vmatprep.subr.bf16.mxu0 0
        %2369 = vmatpush2.bf16.msra.mxu0 0
        %2370 = vmatprep.subr.bf16.mxu0 0
        %2371 = vmatpush2.bf16.msra.mxu0 0
        %2372 = vmatprep.subr.bf16.mxu0 %v2299
        %2373 = vmatpush2.bf16.msra.mxu0 %v2296
        %2374 = vmatprep.mubr.bf16.mxu0 %v2292
        %2375 = vmatmul.mubr.bf16.gmra.mxu0 %v1994
        %v2376 = vpop.f32.mrf.mxu0
        %v2377 = vadd.f32 %v2336, %v2376
        %v2378 = vpop.f32.mrf.mxu0
        %v2379 = vadd.f32 %v2338, %v2378
        %v2380 = vpop.f32.mrf.mxu0
        %v2381 = vpop.f32.mrf.mxu0
        %2382 = vdwg.mxu0
        %s2383 = smul.u32 %s24, 8
        %s2384 = sshra.s32 %s2383, 3
        %s2385 = sand.u32 %s2383, 7
        %s2386 = smul.u32 %s2384, 2
        %s2387 = smul.addr %s2386, 8
        %s2388 = scalar_lea.vmem [#allocation2], %s2387
        %2389 = vst [vmem:[%s2388] sm:$0xff] %v2377
        %vm2390 = vcmask 785408
        %2391 = vst.msk [vmem:[%s2388 + $0x8] sm:$0xff] %vm2390, %v2379
        %v2392 = vlaneseq
        %v2393 = vshrl.u32 %v2392, 7
        %v2394 = vstv %s2383
        %v2395 = vadd.s32 %v2393, %v2394
        %vm2396 = vcmp.lt.s32.totalorder %v2395, 2
        %v2397 = vsel %vm2396, 1, 0
        %vm2398 = vcmp.eq.s32.totalorder %v2397, 1
        %v2399 = vsel %vm2398, %v2377, 0.0
        %v2400 = vsel %vm2398, %v2379, 0.0
        %v2401 = vld [vmem:[#allocation3] sm:$0x3]
        %v2402 = vrot.slane %v2399, 4
        %v2403 = vadd.f32 %v2399, %v2402
        %v2404 = vrot.slane %v2403, 2
        %v2405 = vadd.f32 %v2403, %v2404
        %v2406 = vrot.slane %v2405, 1
        %v2407 = vadd.f32 %v2405, %v2406
        %v2408 = vsel %vm2390, %v2400, 0.0
        %v2409 = vrot.slane %v2408, 4
        %v2410 = vadd.f32 %v2408, %v2409
        %v2411 = vrot.slane %v2410, 2
        %v2412 = vadd.f32 %v2410, %v2411
        %v2413 = vrot.slane %v2412, 1
        %v2414 = vadd.f32 %v2412, %v2413
        %v2417 = vcombine.low %v2407, %v2414
        %v2419 = vunpack.c.l.s4 1966171168
        %v2420 = vunpack.c.0.s8 %v2419
        %v2421 = vlaneseq
        %v2422 = vshrl.u32 %v2421, 7
        %v2423 = vsub.s32 %v2420, %v2422
        %v2424 = vrot.slane %v2417, %v2423
        %v2426 = vunpack.c.l.s4 1966171168
        %v2427 = vunpack.c.0.s8 %v2426
        %v2428 = vlaneseq
        %v2429 = vshrl.u32 %v2428, 7
        %v2430 = vsub.s32 %v2427, %v2429
        %v2431 = vrot.slane %v2424, %v2430
        %v2433 = vadd.f32 %v2401, %v2431
        %v2434 = vlaneseq
        %vm2435 = vcmp.ge.s32.totalorder %v2434, 0
        %vm2436 = vcmp.lt.s32.totalorder %v2434, 224
        %vm2437 = vmand %vm2435, %vm2436
        %2438 = vst.msk [vmem:[#allocation3] sm:$0x3] %vm2437, %v2433
        %v2439 = vld [vmem:[#allocation4] sm:$0x3]
        %v2440 = vmul.f32 %v2399, %v2399
        %v2441 = vmul.f32 %v2400, %v2400
        %v2442 = vrot.slane %v2440, 4
        %v2443 = vadd.f32 %v2440, %v2442
        %v2444 = vrot.slane %v2443, 2
        %v2445 = vadd.f32 %v2443, %v2444
        %v2446 = vrot.slane %v2445, 1
        %v2447 = vadd.f32 %v2445, %v2446
        %v2448 = vsel %vm2390, %v2441, 0.0
        %v2449 = vrot.slane %v2448, 4
        %v2450 = vadd.f32 %v2448, %v2449
        %v2451 = vrot.slane %v2450, 2
        %v2452 = vadd.f32 %v2450, %v2451
        %v2453 = vrot.slane %v2452, 1
        %v2454 = vadd.f32 %v2452, %v2453
        %v2457 = vcombine.low %v2447, %v2454
        %v2459 = vunpack.c.l.s4 1966171168
        %v2460 = vunpack.c.0.s8 %v2459
        %v2461 = vlaneseq
        %v2462 = vshrl.u32 %v2461, 7
        %v2463 = vsub.s32 %v2460, %v2462
        %v2464 = vrot.slane %v2457, %v2463
        %v2466 = vunpack.c.l.s4 1966171168
        %v2467 = vunpack.c.0.s8 %v2466
        %v2468 = vlaneseq
        %v2469 = vshrl.u32 %v2468, 7
        %v2470 = vsub.s32 %v2467, %v2469
        %v2471 = vrot.slane %v2464, %v2470
        %v2473 = vadd.f32 %v2439, %v2471
        %2474 = vst.msk [vmem:[#allocation4] sm:$0x3] %vm2437, %v2473
      $region60: #{discriminator_forward.1} parent=51 // pred_fallthru
        _
      %p2475 = scmp.eq.s32.totalorder %s23, 1
      // Predicated region
      $region61: #{discriminator_forward.1} parent=51 // pred_check
        %p2476 = pneg %p2475
      $region62: #{discriminator_forward.1} parent=51 // pred_check_branch
        %2478 = sbr.rel (%p2476) target = $region64
      $region63: #{discriminator_forward.1} parent=51 // pred_region
        // Predicated region
        $region65: #{discriminator_forward.1} parent=63 // pred_check
          %p2479 = pneg %p357
        $region66: #{discriminator_forward.1} parent=63 // pred_check_branch
          %2481 = sbr.rel (%p2479) target = $region68
        $region67: #{discriminator_forward.1} parent=63 // pred_region
          %v2482 = vld [vmem:[#allocation3] sm:$0x3]
          %v2483 = vld [vmem:[%s4] sm:$0xff]
          %v2484 = vld [vmem:[%s4 + $0x8] sm:$0xff]
          %v2485 = vld [vmem:[%s4 + $0x10] sm:$0xff]
          %v2486 = vld [vmem:[%s4 + $0x18] sm:$0xff]
          %v2487 = vld [vmem:[%s4 + $0x20] sm:$0xff]
          %v2488 = vld [vmem:[%s4 + $0x28] sm:$0xff]
          %v2489 = vld [vmem:[%s4 + $0x30] sm:$0xff]
          %v2490 = vld [vmem:[%s4 + $0x38] sm:$0xff]
          %v2491 = vld [vmem:[%s4 + $0x40] sm:$0xff]
          %v2492 = vld [vmem:[%s4 + $0x48] sm:$0xff]
          %v2493 = vld [vmem:[%s4 + $0x50] sm:$0xff]
          %v2494 = vld [vmem:[%s4 + $0x58] sm:$0xff]
          %v2495 = vld [vmem:[%s4 + $0x60] sm:$0xff]
          %v2496 = vld [vmem:[%s4 + $0x68] sm:$0xff]
          %v2497 = vld [vmem:[%s4 + $0x70] sm:$0xff]
          %v2498 = vld [vmem:[%s4 + $0x78] sm:$0xff]
          %v2499 = vld [vmem:[%s4 + $0x80] sm:$0xff]
          %v2500 = vld [vmem:[%s4 + $0x88] sm:$0xff]
          %v2501 = vld [vmem:[%s4 + $0x90] sm:$0xff]
          %v2502 = vld [vmem:[%s4 + $0x98] sm:$0xff]
          %v2503 = vld [vmem:[%s4 + $0xa0] sm:$0xff]
          %v2504 = vld [vmem:[%s4 + $0xa8] sm:$0xff]
          %v2505 = vld [vmem:[%s4 + $0xb0] sm:$0xff]
          %v2506 = vld [vmem:[%s4 + $0xb8] sm:$0xff]
          %v2507 = vld [vmem:[%s4 + $0xc0] sm:$0xff]
          %v2508 = vld [vmem:[%s4 + $0xc8] sm:$0xff]
          %v2509 = vld [vmem:[%s4 + $0xd0] sm:$0xff]
          %v2510 = vld [vmem:[%s4 + $0xd8] sm:$0xff]
          %v2512 = vlaneseq
          %v2513 = vshrl.u32 %v2512, 7
          %v2514 = vsub.s32 0, %v2513
          %v2515 = vrot.slane %v2482, %v2514
          %v2516 = vlaneseq
          %v2517 = vshrl.u32 %v2516, 7
          %v2518 = vsub.s32 1, %v2517
          %v2519 = vrot.slane %v2482, %v2518
          %vm2521 = vcmask 785408
          %v2522 = vsel %vm2521, %v2519, 0
          %2524 = vmatprep.subr.mxu0 0.0
          %2525 = vmatpush1.msra.mxu0 %v2498
          %2526 = vmatprep.subr.mxu0 0.0
          %2527 = vmatpush1.msra.mxu0 %v2497
          %2528 = vmatprep.subr.mxu0 0.0
          %2529 = vmatpush1.msra.mxu0 %v2496
          %2530 = vmatprep.subr.mxu0 0.0
          %2531 = vmatpush1.msra.mxu0 %v2495
          %2532 = vmatprep.subr.mxu0 0.0
          %2533 = vmatpush1.msra.mxu0 %v2494
          %2534 = vmatprep.subr.mxu0 0.0
          %2535 = vmatpush1.msra.mxu0 %v2493
          %2536 = vmatprep.subr.mxu0 0.0
          %2537 = vmatpush1.msra.mxu0 %v2492
          %2538 = vmatprep.subr.mxu0 0.0
          %2539 = vmatpush1.msra.mxu0 %v2491
          %2540 = vmatprep.subr.mxu0 0.0
          %2541 = vmatpush1.msra.mxu0 %v2490
          %2542 = vmatprep.subr.mxu0 0.0
          %2543 = vmatpush1.msra.mxu0 %v2489
          %2544 = vmatprep.subr.mxu0 0.0
          %2545 = vmatpush1.msra.mxu0 %v2488
          %2546 = vmatprep.subr.mxu0 0.0
          %2547 = vmatpush1.msra.mxu0 %v2487
          %2548 = vmatprep.subr.mxu0 0.0
          %2549 = vmatpush1.msra.mxu0 %v2486
          %2550 = vmatprep.subr.mxu0 0.0
          %2551 = vmatpush1.msra.mxu0 %v2485
          %2552 = vmatprep.subr.mxu0 0.0
          %2553 = vmatpush1.msra.mxu0 %v2484
          %2554 = vmatprep.subr.mxu0 0.0
          %2555 = vmatpush1.msra.mxu0 %v2483
          %2556 = vmatprep.subr.mxu0 0.0
          %2557 = vmatpush2.msra.mxu0 0.0
          %2558 = vmatprep.subr.mxu0 0.0
          %2559 = vmatpush2.msra.mxu0 0.0
          %2560 = vmatprep.subr.mxu0 0.0
          %2561 = vmatpush2.msra.mxu0 0.0
          %2562 = vmatprep.subr.mxu0 0.0
          %2563 = vmatpush2.msra.mxu0 0.0
          %2564 = vmatprep.subr.mxu0 0.0
          %2565 = vmatpush2.msra.mxu0 %v2510
          %2566 = vmatprep.subr.mxu0 0.0
          %2567 = vmatpush2.msra.mxu0 %v2509
          %2568 = vmatprep.subr.mxu0 0.0
          %2569 = vmatpush2.msra.mxu0 %v2508
          %2570 = vmatprep.subr.mxu0 0.0
          %2571 = vmatpush2.msra.mxu0 %v2507
          %2572 = vmatprep.subr.mxu0 0.0
          %2573 = vmatpush2.msra.mxu0 %v2506
          %2574 = vmatprep.subr.mxu0 0.0
          %2575 = vmatpush2.msra.mxu0 %v2505
          %2576 = vmatprep.subr.mxu0 0.0
          %2577 = vmatpush2.msra.mxu0 %v2504
          %2578 = vmatprep.subr.mxu0 0.0
          %2579 = vmatpush2.msra.mxu0 %v2503
          %2580 = vmatprep.subr.mxu0 0.0
          %2581 = vmatpush2.msra.mxu0 %v2502
          %2582 = vmatprep.subr.mxu0 0.0
          %2583 = vmatpush2.msra.mxu0 %v2501
          %2584 = vmatprep.subr.mxu0 0.0
          %2585 = vmatpush2.msra.mxu0 %v2500
          %2586 = vmatprep.subr.mxu0 0.0
          %2587 = vmatpush2.msra.mxu0 %v2499
          %2588 = vmatprep.mubr.f32.mxu0 %v2522
          %2589 = vmatmul.mubr.f32.gmra.mxu0 %v2515
          %v2590 = vpop.f32.mrf.mxu0
          %v2591 = vadd.f32 0.0, %v2590
          %v2592 = vpop.f32.mrf.mxu0
          %2593 = vdwg.mxu0
          %v2594 = vld [vmem:[#allocation4] sm:$0x3]
          %v2596 = vlaneseq
          %v2597 = vshrl.u32 %v2596, 7
          %v2598 = vsub.s32 0, %v2597
          %v2599 = vrot.slane %v2594, %v2598
          %v2600 = vlaneseq
          %v2601 = vshrl.u32 %v2600, 7
          %v2602 = vsub.s32 1, %v2601
          %v2603 = vrot.slane %v2594, %v2602
          %v2605 = vsel %vm2521, %v2603, 0
          %2607 = vmatprep.subr.mxu0 0.0
          %2608 = vmatpush1.msra.mxu0 %v2498
          %2609 = vmatprep.subr.mxu0 0.0
          %2610 = vmatpush1.msra.mxu0 %v2497
          %2611 = vmatprep.subr.mxu0 0.0
          %2612 = vmatpush1.msra.mxu0 %v2496
          %2613 = vmatprep.subr.mxu0 0.0
          %2614 = vmatpush1.msra.mxu0 %v2495
          %2615 = vmatprep.subr.mxu0 0.0
          %2616 = vmatpush1.msra.mxu0 %v2494
          %2617 = vmatprep.subr.mxu0 0.0
          %2618 = vmatpush1.msra.mxu0 %v2493
          %2619 = vmatprep.subr.mxu0 0.0
          %2620 = vmatpush1.msra.mxu0 %v2492
          %2621 = vmatprep.subr.mxu0 0.0
          %2622 = vmatpush1.msra.mxu0 %v2491
          %2623 = vmatprep.subr.mxu0 0.0
          %2624 = vmatpush1.msra.mxu0 %v2490
          %2625 = vmatprep.subr.mxu0 0.0
          %2626 = vmatpush1.msra.mxu0 %v2489
          %2627 = vmatprep.subr.mxu0 0.0
          %2628 = vmatpush1.msra.mxu0 %v2488
          %2629 = vmatprep.subr.mxu0 0.0
          %2630 = vmatpush1.msra.mxu0 %v2487
          %2631 = vmatprep.subr.mxu0 0.0
          %2632 = vmatpush1.msra.mxu0 %v2486
          %2633 = vmatprep.subr.mxu0 0.0
          %2634 = vmatpush1.msra.mxu0 %v2485
          %2635 = vmatprep.subr.mxu0 0.0
          %2636 = vmatpush1.msra.mxu0 %v2484
          %2637 = vmatprep.subr.mxu0 0.0
          %2638 = vmatpush1.msra.mxu0 %v2483
          %2639 = vmatprep.subr.mxu0 0.0
          %2640 = vmatpush2.msra.mxu0 0.0
          %2641 = vmatprep.subr.mxu0 0.0
          %2642 = vmatpush2.msra.mxu0 0.0
          %2643 = vmatprep.subr.mxu0 0.0
          %2644 = vmatpush2.msra.mxu0 0.0
          %2645 = vmatprep.subr.mxu0 0.0
          %2646 = vmatpush2.msra.mxu0 0.0
          %2647 = vmatprep.subr.mxu0 0.0
          %2648 = vmatpush2.msra.mxu0 %v2510
          %2649 = vmatprep.subr.mxu0 0.0
          %2650 = vmatpush2.msra.mxu0 %v2509
          %2651 = vmatprep.subr.mxu0 0.0
          %2652 = vmatpush2.msra.mxu0 %v2508
          %2653 = vmatprep.subr.mxu0 0.0
          %2654 = vmatpush2.msra.mxu0 %v2507
          %2655 = vmatprep.subr.mxu0 0.0
          %2656 = vmatpush2.msra.mxu0 %v2506
          %2657 = vmatprep.subr.mxu0 0.0
          %2658 = vmatpush2.msra.mxu0 %v2505
          %2659 = vmatprep.subr.mxu0 0.0
          %2660 = vmatpush2.msra.mxu0 %v2504
          %2661 = vmatprep.subr.mxu0 0.0
          %2662 = vmatpush2.msra.mxu0 %v2503
          %2663 = vmatprep.subr.mxu0 0.0
          %2664 = vmatpush2.msra.mxu0 %v2502
          %2665 = vmatprep.subr.mxu0 0.0
          %2666 = vmatpush2.msra.mxu0 %v2501
          %2667 = vmatprep.subr.mxu0 0.0
          %2668 = vmatpush2.msra.mxu0 %v2500
          %2669 = vmatprep.subr.mxu0 0.0
          %2670 = vmatpush2.msra.mxu0 %v2499
          %2671 = vmatprep.mubr.f32.mxu0 %v2605
          %2672 = vmatmul.mubr.f32.gmra.mxu0 %v2599
          %v2673 = vpop.f32.mrf.mxu0
          %v2674 = vadd.f32 0.0, %v2673
          %v2675 = vpop.f32.mrf.mxu0
          %2676 = vdwg.mxu0
          %v2677 = vmul.f32 %v2591, 0.010204081
          %v2678 = vmul.f32 %v2674, 0.010204081
          %v2679 = vmul.f32 %v2677, %v2677
          %v2680 = vsub.f32 %v2678, %v2679
          %v2681 = vld [vmem:[%s5] sm:$0x1]
          %v2682 = vadd.f32 %v2680, 1e-05
          %v2683 = vrsqrt.pop %v2682
          %v2684 = vmul.f32 %v2681, %v2683
          %v2685 = vld [vmem:[%s6] sm:$0x1]
          %v2686 = vmul.f32 %v2677, %v2684
          %v2687 = vsub.f32 %v2685, %v2686
          %v2688 = vld [vmem:[%s3] sm:$0xff]
          %v2690 = vcombine.high %v2688, %v2688
          %vm2691 = vcmask 31744
          %v2693 = vsel %vm2691, %v2684, 0
          %vm2695 = vcmask 1043456
          %v2696 = vsel %vm2695, %v2688, 0
          %v2698 = vsel %vm2695, %v2690, 0
          %2700 = vmatprep.subr.mxu0 0.0
          %2701 = vmatpush1.msra.mxu0 0.0
          %2702 = vmatprep.subr.mxu0 0.0
          %2703 = vmatpush1.msra.mxu0 0.0
          %2704 = vmatprep.subr.mxu0 0.0
          %2705 = vmatpush1.msra.mxu0 0.0
          %2706 = vmatprep.subr.mxu0 0.0
          %2707 = vmatpush1.msra.mxu0 0.0
          %2708 = vmatprep.subr.mxu0 0.0
          %2709 = vmatpush1.msra.mxu0 0.0
          %2710 = vmatprep.subr.mxu0 0.0
          %2711 = vmatpush1.msra.mxu0 0.0
          %2712 = vmatprep.subr.mxu0 0.0
          %2713 = vmatpush1.msra.mxu0 0.0
          %2714 = vmatprep.subr.mxu0 0.0
          %2715 = vmatpush1.msra.mxu0 0.0
          %2716 = vmatprep.subr.mxu0 0.0
          %2717 = vmatpush1.msra.mxu0 0.0
          %2718 = vmatprep.subr.mxu0 0.0
          %2719 = vmatpush1.msra.mxu0 0.0
          %2720 = vmatprep.subr.mxu0 0.0
          %2721 = vmatpush1.msra.mxu0 0.0
          %2722 = vmatprep.subr.mxu0 0.0
          %2723 = vmatpush1.msra.mxu0 0.0
          %2724 = vmatprep.subr.mxu0 0.0
          %2725 = vmatpush1.msra.mxu0 0.0
          %2726 = vmatprep.subr.mxu0 0.0
          %2727 = vmatpush1.msra.mxu0 0.0
          %2728 = vmatprep.subr.mxu0 0.0
          %2729 = vmatpush1.msra.mxu0 0.0
          %2730 = vmatprep.subr.mxu0 %v2698
          %2731 = vmatpush1.msra.mxu0 %v2696
          %2732 = vmatprep.subr.mxu0 0.0
          %2733 = vmatpush2.msra.mxu0 0.0
          %2734 = vmatprep.subr.mxu0 0.0
          %2735 = vmatpush2.msra.mxu0 0.0
          %2736 = vmatprep.subr.mxu0 0.0
          %2737 = vmatpush2.msra.mxu0 0.0
          %2738 = vmatprep.subr.mxu0 0.0
          %2739 = vmatpush2.msra.mxu0 0.0
          %2740 = vmatprep.subr.mxu0 0.0
          %2741 = vmatpush2.msra.mxu0 0.0
          %2742 = vmatprep.subr.mxu0 0.0
          %2743 = vmatpush2.msra.mxu0 0.0
          %2744 = vmatprep.subr.mxu0 0.0
          %2745 = vmatpush2.msra.mxu0 0.0
          %2746 = vmatprep.subr.mxu0 0.0
          %2747 = vmatpush2.msra.mxu0 0.0
          %2748 = vmatprep.subr.mxu0 0.0
          %2749 = vmatpush2.msra.mxu0 0.0
          %2750 = vmatprep.subr.mxu0 0.0
          %2751 = vmatpush2.msra.mxu0 0.0
          %2752 = vmatprep.subr.mxu0 0.0
          %2753 = vmatpush2.msra.mxu0 0.0
          %2754 = vmatprep.subr.mxu0 0.0
          %2755 = vmatpush2.msra.mxu0 0.0
          %2756 = vmatprep.subr.mxu0 0.0
          %2757 = vmatpush2.msra.mxu0 0.0
          %2758 = vmatprep.subr.mxu0 0.0
          %2759 = vmatpush2.msra.mxu0 0.0
          %2760 = vmatprep.subr.mxu0 0.0
          %2761 = vmatpush2.msra.mxu0 0.0
          %2762 = vmatprep.subr.mxu0 0.0
          %2763 = vmatpush2.msra.mxu0 0.0
          %2764 = vmatprep.mubr.f32.mxu0 0.0
          %2765 = vmatmul.mubr.f32.gmra.mxu0 %v2693
          %v2766 = vpop.f32.mrf.mxu0
          %v2767 = vadd.f32 0.0, %v2766
          %v2768 = vpop.f32.mrf.mxu0
          %v2769 = vadd.f32 0.0, %v2768
          %2770 = vdwg.mxu0
          %v2773 = vcombine.low %v2767, %v2769
          %v2775 = vunpack.c.l.s4 1966171168
          %v2776 = vunpack.c.0.s8 %v2775
          %v2777 = vlaneseq
          %v2778 = vshrl.u32 %v2777, 7
          %v2779 = vsub.s32 %v2776, %v2778
          %v2780 = vrot.slane %v2773, %v2779
          %v2782 = vunpack.c.l.s4 1966171168
          %v2783 = vunpack.c.0.s8 %v2782
          %v2784 = vlaneseq
          %v2785 = vshrl.u32 %v2784, 7
          %v2786 = vsub.s32 %v2783, %v2785
          %v2787 = vrot.slane %v2780, %v2786
          %v2789 = vlaneseq
          %vm2790 = vcmp.ge.s32.totalorder %v2789, 0
          %vm2791 = vcmp.lt.s32.totalorder %v2789, 224
          %vm2792 = vmand %vm2790, %vm2791
          %2793 = vst.msk [vmem:[#allocation5] sm:$0x3] %vm2792, %v2787
          %v2794 = vld [vmem:[%s3] sm:$0xff]
          %v2796 = vcombine.high %v2794, %v2794
          %v2798 = vsel %vm2691, %v2687, 0
          %v2800 = vsel %vm2695, %v2794, 0
          %v2802 = vsel %vm2695, %v2796, 0
          %2804 = vmatprep.subr.mxu0 0.0
          %2805 = vmatpush1.msra.mxu0 0.0
          %2806 = vmatprep.subr.mxu0 0.0
          %2807 = vmatpush1.msra.mxu0 0.0
          %2808 = vmatprep.subr.mxu0 0.0
          %2809 = vmatpush1.msra.mxu0 0.0
          %2810 = vmatprep.subr.mxu0 0.0
          %2811 = vmatpush1.msra.mxu0 0.0
          %2812 = vmatprep.subr.mxu0 0.0
          %2813 = vmatpush1.msra.mxu0 0.0
          %2814 = vmatprep.subr.mxu0 0.0
          %2815 = vmatpush1.msra.mxu0 0.0
          %2816 = vmatprep.subr.mxu0 0.0
          %2817 = vmatpush1.msra.mxu0 0.0
          %2818 = vmatprep.subr.mxu0 0.0
          %2819 = vmatpush1.msra.mxu0 0.0
          %2820 = vmatprep.subr.mxu0 0.0
          %2821 = vmatpush1.msra.mxu0 0.0
          %2822 = vmatprep.subr.mxu0 0.0
          %2823 = vmatpush1.msra.mxu0 0.0
          %2824 = vmatprep.subr.mxu0 0.0
          %2825 = vmatpush1.msra.mxu0 0.0
          %2826 = vmatprep.subr.mxu0 0.0
          %2827 = vmatpush1.msra.mxu0 0.0
          %2828 = vmatprep.subr.mxu0 0.0
          %2829 = vmatpush1.msra.mxu0 0.0
          %2830 = vmatprep.subr.mxu0 0.0
          %2831 = vmatpush1.msra.mxu0 0.0
          %2832 = vmatprep.subr.mxu0 0.0
          %2833 = vmatpush1.msra.mxu0 0.0
          %2834 = vmatprep.subr.mxu0 %v2802
          %2835 = vmatpush1.msra.mxu0 %v2800
          %2836 = vmatprep.subr.mxu0 0.0
          %2837 = vmatpush2.msra.mxu0 0.0
          %2838 = vmatprep.subr.mxu0 0.0
          %2839 = vmatpush2.msra.mxu0 0.0
          %2840 = vmatprep.subr.mxu0 0.0
          %2841 = vmatpush2.msra.mxu0 0.0
          %2842 = vmatprep.subr.mxu0 0.0
          %2843 = vmatpush2.msra.mxu0 0.0
          %2844 = vmatprep.subr.mxu0 0.0
          %2845 = vmatpush2.msra.mxu0 0.0
          %2846 = vmatprep.subr.mxu0 0.0
          %2847 = vmatpush2.msra.mxu0 0.0
          %2848 = vmatprep.subr.mxu0 0.0
          %2849 = vmatpush2.msra.mxu0 0.0
          %2850 = vmatprep.subr.mxu0 0.0
          %2851 = vmatpush2.msra.mxu0 0.0
          %2852 = vmatprep.subr.mxu0 0.0
          %2853 = vmatpush2.msra.mxu0 0.0
          %2854 = vmatprep.subr.mxu0 0.0
          %2855 = vmatpush2.msra.mxu0 0.0
          %2856 = vmatprep.subr.mxu0 0.0
          %2857 = vmatpush2.msra.mxu0 0.0
          %2858 = vmatprep.subr.mxu0 0.0
          %2859 = vmatpush2.msra.mxu0 0.0
          %2860 = vmatprep.subr.mxu0 0.0
          %2861 = vmatpush2.msra.mxu0 0.0
          %2862 = vmatprep.subr.mxu0 0.0
          %2863 = vmatpush2.msra.mxu0 0.0
          %2864 = vmatprep.subr.mxu0 0.0
          %2865 = vmatpush2.msra.mxu0 0.0
          %2866 = vmatprep.subr.mxu0 0.0
          %2867 = vmatpush2.msra.mxu0 0.0
          %2868 = vmatprep.mubr.f32.mxu0 0.0
          %2869 = vmatmul.mubr.f32.gmra.mxu0 %v2798
          %v2870 = vpop.f32.mrf.mxu0
          %v2871 = vadd.f32 0.0, %v2870
          %v2872 = vpop.f32.mrf.mxu0
          %v2873 = vadd.f32 0.0, %v2872
          %2874 = vdwg.mxu0
          %v2877 = vcombine.low %v2871, %v2873
          %v2879 = vunpack.c.l.s4 1966171168
          %v2880 = vunpack.c.0.s8 %v2879
          %v2881 = vlaneseq
          %v2882 = vshrl.u32 %v2881, 7
          %v2883 = vsub.s32 %v2880, %v2882
          %v2884 = vrot.slane %v2877, %v2883
          %v2886 = vunpack.c.l.s4 1966171168
          %v2887 = vunpack.c.0.s8 %v2886
          %v2888 = vlaneseq
          %v2889 = vshrl.u32 %v2888, 7
          %v2890 = vsub.s32 %v2887, %v2889
          %v2891 = vrot.slane %v2884, %v2890
          %2893 = vst.msk [vmem:[#allocation6] sm:$0x3] %vm2792, %v2891
        $region68: #{discriminator_forward.1} parent=63 // pred_fallthru
          _
        %s2894 = smul.u32 %s24, 8
        %s2895 = sshra.s32 %s2894, 3
        %s2896 = sand.u32 %s2894, 7
        %s2897 = smul.u32 %s2895, 2
        %s2898 = smul.addr %s2897, 8
        %s2899 = scalar_lea.vmem [#allocation2], %s2898
        %v2900 = vld [vmem:[%s2899] sm:$0xff]
        %v2901 = vld [vmem:[%s2899 + $0x8] sm:$0xff]
        %v2902 = vld [vmem:[#allocation5] sm:$0x3]
        %v2904 = vlaneseq
        %v2905 = vshrl.u32 %v2904, 7
        %v2906 = vsub.s32 0, %v2905
        %v2907 = vrot.slane %v2902, %v2906
        %v2908 = vlaneseq
        %v2909 = vshrl.u32 %v2908, 7
        %v2910 = vsub.s32 1, %v2909
        %v2911 = vrot.slane %v2902, %v2910
        %v2914 = vmul.f32 %v2900, %v2907
        %v2915 = vmul.f32 %v2901, %v2911
        %v2916 = vld [vmem:[#allocation6] sm:$0x3]
        %v2918 = vlaneseq
        %v2919 = vshrl.u32 %v2918, 7
        %v2920 = vsub.s32 0, %v2919
        %v2921 = vrot.slane %v2916, %v2920
        %v2922 = vlaneseq
        %v2923 = vshrl.u32 %v2922, 7
        %v2924 = vsub.s32 1, %v2923
        %v2925 = vrot.slane %v2916, %v2924
        %v2928 = vadd.f32 %v2914, %v2921
        %v2929 = vadd.f32 %v2915, %v2925
        %vm2930 = vcmp.ge.f32.partialorder %v2928, 0.0
        %vm2931 = vcmp.ge.f32.partialorder %v2929, 0.0
        %v2932 = vmul.f32 %v2928, 0.001
        %v2933 = vmul.f32 %v2929, 0.001
        %v2934 = vsel %vm2930, %v2928, %v2932
        %v2935 = vsel %vm2931, %v2929, %v2933
        %v2936 = vld [vmem:[%s7] sm:$0xff]
        %v2937 = vld [vmem:[%s7 + $0x8] sm:$0xff]
        %v2938 = vld [vmem:[%s7 + $0x10] sm:$0xff]
        %v2939 = vld [vmem:[%s7 + $0x18] sm:$0xff]
        %v2940 = vld [vmem:[%s7 + $0x20] sm:$0xff]
        %v2941 = vld [vmem:[%s7 + $0x28] sm:$0xff]
        %v2942 = vld [vmem:[%s7 + $0x30] sm:$0xff]
        %v2943 = vld [vmem:[%s7 + $0x38] sm:$0xff]
        %v2944 = vld [vmem:[%s7 + $0x40] sm:$0xff]
        %v2945 = vld [vmem:[%s7 + $0x48] sm:$0xff]
        %v2946 = vld [vmem:[%s7 + $0x50] sm:$0xff]
        %v2947 = vld [vmem:[%s7 + $0x58] sm:$0xff]
        %v2948 = vld [vmem:[%s7 + $0x60] sm:$0xff]
        %v2949 = vld [vmem:[%s7 + $0x68] sm:$0xff]
        %v2950 = vld [vmem:[%s7 + $0x70] sm:$0xff]
        %v2951 = vld [vmem:[%s7 + $0x78] sm:$0xff]
        %v2952 = vld [vmem:[%s7 + $0x80] sm:$0xff]
        %v2953 = vld [vmem:[%s7 + $0x88] sm:$0xff]
        %v2954 = vld [vmem:[%s7 + $0x90] sm:$0xff]
        %v2955 = vld [vmem:[%s7 + $0x98] sm:$0xff]
        %v2956 = vld [vmem:[%s7 + $0xa0] sm:$0xff]
        %v2957 = vld [vmem:[%s7 + $0xa8] sm:$0xff]
        %v2958 = vld [vmem:[%s7 + $0xb0] sm:$0xff]
        %v2959 = vld [vmem:[%s7 + $0xb8] sm:$0xff]
        %v2960 = vld [vmem:[%s7 + $0xc0] sm:$0xff]
        %v2961 = vld [vmem:[%s7 + $0xc8] sm:$0xff]
        %v2962 = vld [vmem:[%s7 + $0xd0] sm:$0xff]
        %v2963 = vld [vmem:[%s7 + $0xd8] sm:$0xff]
        %vm2964 = vcmask 785408
        %v2966 = vsel %vm2964, %v2935, 0
        %2968 = vmatprep.subr.mxu0 0.0
        %2969 = vmatpush1.msra.mxu0 %v2951
        %2970 = vmatprep.subr.mxu0 0.0
        %2971 = vmatpush1.msra.mxu0 %v2950
        %2972 = vmatprep.subr.mxu0 0.0
        %2973 = vmatpush1.msra.mxu0 %v2949
        %2974 = vmatprep.subr.mxu0 0.0
        %2975 = vmatpush1.msra.mxu0 %v2948
        %2976 = vmatprep.subr.mxu0 0.0
        %2977 = vmatpush1.msra.mxu0 %v2947
        %2978 = vmatprep.subr.mxu0 0.0
        %2979 = vmatpush1.msra.mxu0 %v2946
        %2980 = vmatprep.subr.mxu0 0.0
        %2981 = vmatpush1.msra.mxu0 %v2945
        %2982 = vmatprep.subr.mxu0 0.0
        %2983 = vmatpush1.msra.mxu0 %v2944
        %2984 = vmatprep.subr.mxu0 0.0
        %2985 = vmatpush1.msra.mxu0 %v2943
        %2986 = vmatprep.subr.mxu0 0.0
        %2987 = vmatpush1.msra.mxu0 %v2942
        %2988 = vmatprep.subr.mxu0 0.0
        %2989 = vmatpush1.msra.mxu0 %v2941
        %2990 = vmatprep.subr.mxu0 0.0
        %2991 = vmatpush1.msra.mxu0 %v2940
        %2992 = vmatprep.subr.mxu0 0.0
        %2993 = vmatpush1.msra.mxu0 %v2939
        %2994 = vmatprep.subr.mxu0 0.0
        %2995 = vmatpush1.msra.mxu0 %v2938
        %2996 = vmatprep.subr.mxu0 0.0
        %2997 = vmatpush1.msra.mxu0 %v2937
        %2998 = vmatprep.subr.mxu0 0.0
        %2999 = vmatpush1.msra.mxu0 %v2936
        %3000 = vmatprep.subr.mxu0 0.0
        %3001 = vmatpush2.msra.mxu0 0.0
        %3002 = vmatprep.subr.mxu0 0.0
        %3003 = vmatpush2.msra.mxu0 0.0
        %3004 = vmatprep.subr.mxu0 0.0
        %3005 = vmatpush2.msra.mxu0 0.0
        %3006 = vmatprep.subr.mxu0 0.0
        %3007 = vmatpush2.msra.mxu0 0.0
        %3008 = vmatprep.subr.mxu0 0.0
        %3009 = vmatpush2.msra.mxu0 %v2963
        %3010 = vmatprep.subr.mxu0 0.0
        %3011 = vmatpush2.msra.mxu0 %v2962
        %3012 = vmatprep.subr.mxu0 0.0
        %3013 = vmatpush2.msra.mxu0 %v2961
        %3014 = vmatprep.subr.mxu0 0.0
        %3015 = vmatpush2.msra.mxu0 %v2960
        %3016 = vmatprep.subr.mxu0 0.0
        %3017 = vmatpush2.msra.mxu0 %v2959
        %3018 = vmatprep.subr.mxu0 0.0
        %3019 = vmatpush2.msra.mxu0 %v2958
        %3020 = vmatprep.subr.mxu0 0.0
        %3021 = vmatpush2.msra.mxu0 %v2957
        %3022 = vmatprep.subr.mxu0 0.0
        %3023 = vmatpush2.msra.mxu0 %v2956
        %3024 = vmatprep.subr.mxu0 0.0
        %3025 = vmatpush2.msra.mxu0 %v2955
        %3026 = vmatprep.subr.mxu0 0.0
        %3027 = vmatpush2.msra.mxu0 %v2954
        %3028 = vmatprep.subr.mxu0 0.0
        %3029 = vmatpush2.msra.mxu0 %v2953
        %3030 = vmatprep.subr.mxu0 0.0
        %3031 = vmatpush2.msra.mxu0 %v2952
        %3032 = vmatprep.mubr.f32.mxu0 %v2966
        %3033 = vmatmul.mubr.f32.gmra.mxu0 %v2934
        %v3034 = vpop.f32.mrf.mxu0
        %v3035 = vadd.f32 0.0, %v3034
        %v3036 = vpop.f32.mrf.mxu0
        %3037 = vdwg.mxu0
        %v3038 = vxor.u32 %v3035, 2147483648
        %v3039 = vmul.f32 %v3038, 1.442695
        %v3040 = vpow.pop %v3039
        %v3041 = vadd.f32 %v3040, 1.0
        %v3042 = vrcp.pop %v3041
        %v3043 = vmul.f32 1.0, %v3042
        %vm3044 = vcmask 7168
        %3045 = vst.msk [vmem:[%s353] sm:$0xff] %vm3044, %v3043
      $region64: #{discriminator_forward.1} parent=51 // pred_fallthru
        _
      %s3046 = smul.u32 %s24, %s23
      %p3047 = scmp.lt.s32.totalorder %s3046, 0
      %s3048 = scalar_select %p3047, %s3046, 0
      %s3049 = smul.addr %s3048, 8
      %s3050 = scalar_lea.vmem %s8, %s3049
      // Predicated region
      $region69: #{discriminator_forward.1} parent=51 // pred_check
        %p3051 = pneg %p228
      $region70: #{discriminator_forward.1} parent=51 // pred_check_branch
        %3053 = sbr.rel (%p3051) target = $region72
      $region71: #{discriminator_forward.1} parent=51 // pred_region
        %s3054 = smul.u32 %s24, %s23
      $region72: #{discriminator_forward.1} parent=51 // pred_fallthru
        _
    $region52: #{discriminator_forward.1} parent=5 // pred_fallthru
      _
    %p3055 = scmp.le.s32.totalorder 2, %s14
    // Predicated region
    $region73: #{discriminator_forward.1} parent=5 // pred_check
      %p3056 = pneg %p3055
    $region74: #{discriminator_forward.1} parent=5 // pred_check_branch
      %3058 = sbr.rel (%p3056) target = $region76
    $region75: #{discriminator_forward.1} parent=5 // pred_region
      %s3059 = ssub.s32 %s14, 2
      // Predicated region
      $region77: #{discriminator_forward.1} parent=75 // pred_check
        %p3060 = pneg %p234
      $region78: #{discriminator_forward.1} parent=75 // pred_check_branch
        %3062 = sbr.rel (%p3060) target = $region80
      $region79: #{discriminator_forward.1} parent=75 // pred_region
        %s3063 = smul.u32 %s26, %s25
        %p3064 = scmp.lt.s32.totalorder %s3063, 0
        %s3065 = scalar_select %p3064, %s3063, 0
        %s3066 = smul.addr %s3065, 8
        %s3067 = scalar_lea.vmem %s8, %s3066
      $region80: #{discriminator_forward.1} parent=75 // pred_fallthru
        _
    $region76: #{discriminator_forward.1} parent=5 // pred_fallthru
      _
  $region6: #{discriminator_forward.1} parent=0 // loop_footer
    %s18 = sadd.s32 1, %s14
  $region7: #{discriminator_forward.1} parent=0 // loop_footer_branch
    %13 = sbr.rel target = $region3
  $region8: #{discriminator_forward.1} parent=0 // loop_exit
    _

</llo_original>
